<compile_context>
chip_gen: v6e
topology: v6e:2x2x1
jax: 0.10.0
libtpu: 0.0.40
codegen_flags: <defaults>
</compile_context>

<pallas_src>
import jax
import jax.numpy as jnp
from jax.experimental import pallas as pl
from jax.experimental.pallas import tpu as pltpu

CONV1_SPB = 32    # samples per conv1 block -> 32*196 = 6272 lanes (mult. of 128)
CONV2_SPB = 128   # samples per conv2 block -> 128*25 = 3200 lanes (mult. of 128)


def _round_up(x, m):
    return (x + m - 1) // m * m


def _vmem_limit_bytes():
    """Per-generation scoped-VMEM budget: ~half of physical, capped at 96 MiB."""
    try:
        cap = pltpu.get_tpu_info().vmem_capacity_bytes
    except Exception:
        cap = 128 * 1024 * 1024
    return int(min(cap // 2, 96 * 1024 * 1024))


_VMEM_LIMIT = _vmem_limit_bytes()


def _pad_batch(b):
    """Pad the raw batch once so every conv/fc lane tile divides M exactly."""
    if b <= 32:
        return b
    if b <= 128:
        return _round_up(b, 32)
    return _round_up(b, 128)


# --------------- fused conv + bias + ReLU + 2x2 maxpool kernel ---------------

def _conv_relu_pool_kernel(a_ref, w_ref, b_ref, o_ref):
    """o = relu(max_{corner}(W @ A[corner]) + bias).

    a_ref: (4, K, TM) bf16  im2col patches, split by 2x2 pool corner
    w_ref: (Cout, K)  bf16  resident weights (Cout padded to a multiple of 8)
    b_ref: (Cout, 1)  f32   resident bias (lane-broadcast)
    o_ref: (Cout, TM) bf16  pooled + ReLU'd activation (lane-dense in M)
    """
    w = w_ref[...]
    d0 = jnp.dot(w, a_ref[0], preferred_element_type=jnp.float32)
    d1 = jnp.dot(w, a_ref[1], preferred_element_type=jnp.float32)
    d2 = jnp.dot(w, a_ref[2], preferred_element_type=jnp.float32)
    d3 = jnp.dot(w, a_ref[3], preferred_element_type=jnp.float32)
    acc = jnp.maximum(jnp.maximum(d0, d1), jnp.maximum(d2, d3))   # tree max
    acc = jnp.maximum(acc + b_ref[...], 0.0)                      # f32 epilogue
    o_ref[...] = acc.astype(o_ref.dtype)


def conv_relu_pool(xc, w_mat, bias, spb, kh_size=5, kw_size=5):
    """Valid 5x5 conv + bias + ReLU + 2x2/2 maxpool, fused in one pallas_call.

    xc:    (Cin, B, H, W) bf16 activation
    w_mat: (Cout, K = KH*KW*Cin) bf16, K ordered (kh, kw, ci)
    bias:  (Cout, 1) f32
    spb:   samples per grid block (whole-sample lane tiling)
    returns (Cout, B, PH, PW) bf16 pooled activation.
    """
    Cin, B, H, W = xc.shape
    Cout, K = w_mat.shape
    assert K == kh_size * kw_size * Cin
    OH, OW = H - kh_size + 1, W - kw_size + 1
    PH, PW = OH // 2, OW // 2
    M = B * PH * PW

    # Patch gather (XLA glue), built directly in the (corner, K, M) layout.
    # TODO(synk): fold this gather into the kernel (see module docstring).
    corners = []
    for i in (0, 1):
        for j in (0, 1):
            taps = []
            for kh in range(kh_size):
                for kw in range(kw_size):
                    hs, ws = kh + i, kw + j
                    sl = xc[:, :,
                            hs:hs + 2 * (PH - 1) + 1:2,
                            ws:ws + 2 * (PW - 1) + 1:2]       # (Cin, B, PH, PW)
                    taps.append(sl)
            corners.append(jnp.concatenate(taps, axis=0).reshape(K, M))
    a_all = jnp.stack(corners, axis=0)                         # (4, K, M)

    # Whole-sample lane tile (multiple of 128 when tiled); no padding needed.
    tile_lanes = spb * PH * PW
    if B % spb == 0 and M > tile_lanes:
        tm = tile_lanes
    else:
        tm = M                 # single lane-dense block (block == full array)
    assert M % tm == 0
    grid = (M // tm,)

    out = pl.pallas_call(
        _conv_relu_pool_kernel,
        out_shape=jax.ShapeDtypeStruct((Cout, M), jnp.bfloat16),
        grid=grid,
        in_specs=[
            pl.BlockSpec((4, K, tm), lambda m: (0, 0, m)),
            pl.BlockSpec((Cout, K), lambda m: (0, 0)),
            pl.BlockSpec((Cout, 1), lambda m: (0, 0)),
        ],
        out_specs=pl.BlockSpec((Cout, tm), lambda m: (0, m)),
        compiler_params=pltpu.CompilerParams(
            dimension_semantics=("parallel",),
            vmem_limit_bytes=_VMEM_LIMIT),
    )(a_all, w_mat, bias)

    return out.reshape(Cout, B, PH, PW)


# --------------- fused fc1 -> relu -> fc2 -> relu -> fc3 kernel ---------------

def _fc_chain_kernel(a_ref, w1_ref, b1_ref, w2_ref, b2_ref, w3_ref, b3_ref, o_ref):
    """o = fc3(relu(fc2(relu(fc1(a))))), batch on lanes, f32 intermediates
    (they never leave VMEM), all three weights resident."""
    h = jnp.dot(w1_ref[...], a_ref[...], preferred_element_type=jnp.float32)
    h = jnp.maximum(h + b1_ref[...], 0.0)
    h = jnp.dot(w2_ref[...], h, preferred_element_type=jnp.float32)
    h = jnp.maximum(h + b2_ref[...], 0.0)
    h = jnp.dot(w3_ref[...], h, preferred_element_type=jnp.float32)
    o_ref[...] = h + b3_ref[...]


def fc_chain(a, w1, b1, w2, b2, w3, b3):
    """a: (K1, B) bf16 -> logits.T (N3, B) f32.  B must equal the padded batch."""
    K1, B = a.shape
    N1, N2, N3 = w1.shape[0], w2.shape[0], w3.shape[0]

    # Keep the fc lane tile modest (vreg pressure of the (120, tb) f32
    # intermediate), but give v7x >= 2 grid steps when the batch allows it.
    if B <= 128:
        tb = B
    elif B <= 512:
        tb = 128
    elif B % 256 == 0:
        tb = 256
    else:
        tb = 128
    assert B % tb == 0

    out = pl.pallas_call(
        _fc_chain_kernel,
        out_shape=jax.ShapeDtypeStruct((N3, B), jnp.float32),
        grid=(B // tb,),
        in_specs=[
            pl.BlockSpec((K1, tb), lambda m: (0, m)),
            pl.BlockSpec((N1, K1), lambda m: (0, 0)),
            pl.BlockSpec((N1, 1), lambda m: (0, 0)),
            pl.BlockSpec((N2, N1), lambda m: (0, 0)),
            pl.BlockSpec((N2, 1), lambda m: (0, 0)),
            pl.BlockSpec((N3, N2), lambda m: (0, 0)),
            pl.BlockSpec((N3, 1), lambda m: (0, 0)),
        ],
        out_specs=pl.BlockSpec((N3, tb), lambda m: (0, m)),
        compiler_params=pltpu.CompilerParams(
            dimension_semantics=("parallel",),
            vmem_limit_bytes=_VMEM_LIMIT),
    )(a, w1, b1, w2, b2, w3, b3)
    return out


# ------------------------------- parameters -------------------------------

def init_params(key):
    """PyTorch-layout f32 parameters (nn.Conv2d / nn.Linear fan-in uniform init)."""
    ks = jax.random.split(key, 10)

    def uniform(k, shape, fan_in):
        bound = 1.0 / jnp.sqrt(jnp.float32(fan_in))
        return jax.random.uniform(k, shape, jnp.float32, -bound, bound)

    return {
        "conv1_w": uniform(ks[0], (6, 3, 5, 5), 75),
        "conv1_b": uniform(ks[1], (6,), 75),
        "conv2_w": uniform(ks[2], (16, 6, 5, 5), 150),
        "conv2_b": uniform(ks[3], (16,), 150),
        "fc1_w": uniform(ks[4], (120, 400), 400),
        "fc1_b": uniform(ks[5], (120,), 400),
        "fc2_w": uniform(ks[6], (84, 120), 120),
        "fc2_b": uniform(ks[7], (84,), 120),
        "fc3_w": uniform(ks[8], (10, 84), 84),
        "fc3_b": uniform(ks[9], (10,), 84),
    }


def pack_params(p):
    """One-time repack (outside the jitted forward) into kernel layouts:
    conv weights -> (Cout_pad, K) bf16, K ordered (kh, kw, ci), Cout padded to
    a multiple of 8; fc1 bf16, fc2/fc3 f32 (f32 chain inside the fused fc
    kernel); all biases -> (N, 1) f32 (padded where the weights are)."""
    def conv_pack(w, cout_pad):
        cout, cin, kh, kw = w.shape
        wm = jnp.transpose(w, (0, 2, 3, 1)).reshape(cout, kh * kw * cin)
        if cout_pad > cout:
            wm = jnp.pad(wm, ((0, cout_pad - cout), (0, 0)))
        return wm.astype(jnp.bfloat16)

    def bias_pack(b, n_pad=None):
        b = b.reshape(-1, 1).astype(jnp.float32)
        if n_pad is not None and n_pad > b.shape[0]:
            b = jnp.pad(b, ((0, n_pad - b.shape[0]), (0, 0)))
        return b

    return {
        "conv1_w": conv_pack(p["conv1_w"], 8),
        "conv1_b": bias_pack(p["conv1_b"], 8),
        "conv2_w": conv_pack(p["conv2_w"], 16),
        "conv2_b": bias_pack(p["conv2_b"], 16),
        "fc1_w": p["fc1_w"].astype(jnp.bfloat16),
        "fc1_b": bias_pack(p["fc1_b"]),
        "fc2_w": p["fc2_w"].astype(jnp.float32),
        "fc2_b": bias_pack(p["fc2_b"]),
        "fc3_w": p["fc3_w"].astype(jnp.float32),
        "fc3_b": bias_pack(p["fc3_b"]),
    }


# -------------------------------- forward ----------------------------------

@jax.jit
def cnn_forward(params, x):
    """x: (B, 3, 32, 32) NCHW f32 -> logits (B, 10) f32."""
    B = x.shape[0]
    B_pad = _pad_batch(B)
    if B_pad != B:
        # Pad the small raw input once; nothing expanded is ever padded/copied.
        x = jnp.pad(x, ((0, B_pad - B), (0, 0), (0, 0), (0, 0)))

    xc = jnp.transpose(x, (1, 0, 2, 3)).astype(jnp.bfloat16)        # (3, Bp, 32, 32)

    y = conv_relu_pool(xc, params["conv1_w"], params["conv1_b"],
                       CONV1_SPB)                                   # (8, Bp, 14, 14)
    # Channels 6,7 are zero pad rows; slice them off (fused into the gather).
    y = conv_relu_pool(y[:6], params["conv2_w"], params["conv2_b"],
                       CONV2_SPB)                                   # (16, Bp, 5, 5)

    # torch.flatten(x, 1): feature index = c*25 + h*5 + w; batch goes to lanes.
    a = jnp.transpose(y, (0, 2, 3, 1)).reshape(16 * 5 * 5, B_pad)   # (400, Bp) bf16

    logits_t = fc_chain(a, params["fc1_w"], params["fc1_b"],
                        params["fc2_w"], params["fc2_b"],
                        params["fc3_w"], params["fc3_b"])           # (10, Bp) f32
    logits = logits_t.T                                             # (Bp, 10)
    return logits[:B] if B_pad != B else logits


# ----------------------------- f32 XLA reference -----------------------------

def reference_forward(p, x):
    def conv(z, w, b):
        y = jax.lax.conv_general_dilated(
            z, w, (1, 1), "VALID", dimension_numbers=("NCHW", "OIHW", "NCHW"))
        return jax.nn.relu(y + b[None, :, None, None])

    def pool(z):
        return jax.lax.reduce_window(z, -jnp.inf, jax.lax.max,
                                     (1, 1, 2, 2), (1, 1, 2, 2), "VALID")

    y = pool(conv(x, p["conv1_w"], p["conv1_b"]))
    y = pool(conv(y, p["conv2_w"], p["conv2_b"]))
    y = y.reshape(y.shape[0], -1)
    y = jax.nn.relu(y @ p["fc1_w"].T + p["fc1_b"])
    y = jax.nn.relu(y @ p["fc2_w"].T + p["fc2_b"])
    return y @ p["fc3_w"].T + p["fc3_b"]


if __name__ == "__main__":
    key = jax.random.PRNGKey(0)
    pkey, xkey = jax.random.split(key)
    raw = init_params(pkey)
    packed = pack_params(raw)

    # Spatial size 32 is required by fc1 (16*5*5 after two conv5 + pool2).
    # Primary small test (B=2): single-block path.
    x = jax.random.normal(xkey, (2, 3, 32, 32), jnp.float32)
    out = cnn_forward(packed, x)
    jax.block_until_ready(out)
    assert out.shape == (2, 10)
    ref = reference_forward(raw, x)
    assert jnp.allclose(out, ref, rtol=5e-2, atol=3e-2), (
        f"B=2 mismatch vs f32 reference: max abs err = {jnp.max(jnp.abs(out - ref))}")

    # Second test (B=48): exercises raw-batch padding (48 -> 64) and the
    # multi-step conv1 grid (2 x 6272-lane blocks).
    x2 = jax.random.normal(jax.random.PRNGKey(1), (48, 3, 32, 32), jnp.float32)
    out2 = cnn_forward(packed, x2)
    jax.block_until_ready(out2)
    assert out2.shape == (48, 10)
    ref2 = reference_forward(raw, x2)
    assert jnp.allclose(out2, ref2, rtol=5e-2, atol=3e-2), (
        f"B=48 mismatch vs f32 reference: max abs err = {jnp.max(jnp.abs(out2 - ref2))}")

    print("KERNEL_OK")
</pallas_src>

<mosaic_0001>
module attributes {stable_mosaic.version = 11 : i64} {
  func.func @_conv_relu_pool_kernel(%arg0: i32, %arg1: memref<4x75x392xbf16, #tpu.memory_space<vmem>>, %arg2: memref<8x75xbf16, #tpu.memory_space<vmem>>, %arg3: memref<8x1xf32, #tpu.memory_space<vmem>>, %arg4: memref<8x392xbf16, #tpu.memory_space<vmem>>) attributes {dimension_semantics = [#tpu.dimension_semantics<parallel>], iteration_bounds = array<i64: 1>, scalar_prefetch = 0 : i64, scratch_operands = 0 : i64, tpu.core_type = #tpu.core_type<tc>, window_params = [{transform_indices = @transform_0, window_bounds = array<i64: 4, 75, 392>}, {pipeline_mode = #tpu.pipeline_mode<synchronous>, transform_indices = @transform_1, window_bounds = array<i64: 8, 75>}, {pipeline_mode = #tpu.pipeline_mode<synchronous>, transform_indices = @transform_2, window_bounds = array<i64: 8, 1>}, {transform_indices = @transform_3, window_bounds = array<i64: 8, 392>}]} {
    %c0 = arith.constant 0 : index
    %c0_0 = arith.constant 0 : index
    %0 = vector.load %arg2[%c0, %c0_0] : memref<8x75xbf16, #tpu.memory_space<vmem>>, vector<8x75xbf16>
    %c0_1 = arith.constant 0 : index
    %c0_2 = arith.constant 0 : index
    %c0_3 = arith.constant 0 : index
    %1 = vector.load %arg1[%c0_1, %c0_2, %c0_3] : memref<4x75x392xbf16, #tpu.memory_space<vmem>>, vector<1x75x392xbf16>
    %2 = vector.shape_cast %1 : vector<1x75x392xbf16> to vector<75x392xbf16>
    %cst = arith.constant dense<0.000000e+00> : vector<8x392xf32>
    %3 = tpu.matmul %0, %2, %cst {dimension_numbers = #tpu.dot_dimension_numbers<[1], [0], [0], [1], [0, 0, 1, 1], [], []>} : vector<8x75xbf16>, vector<75x392xbf16>, vector<8x392xf32> -> vector<8x392xf32>
    %c1 = arith.constant 1 : index
    %c0_4 = arith.constant 0 : index
    %c0_5 = arith.constant 0 : index
    %4 = vector.load %arg1[%c1, %c0_4, %c0_5] : memref<4x75x392xbf16, #tpu.memory_space<vmem>>, vector<1x75x392xbf16>
    %5 = vector.shape_cast %4 : vector<1x75x392xbf16> to vector<75x392xbf16>
    %cst_6 = arith.constant dense<0.000000e+00> : vector<8x392xf32>
    %6 = tpu.matmul %0, %5, %cst_6 {dimension_numbers = #tpu.dot_dimension_numbers<[1], [0], [0], [1], [0, 0, 1, 1], [], []>} : vector<8x75xbf16>, vector<75x392xbf16>, vector<8x392xf32> -> vector<8x392xf32>
    %c2 = arith.constant 2 : index
    %c0_7 = arith.constant 0 : index
    %c0_8 = arith.constant 0 : index
    %7 = vector.load %arg1[%c2, %c0_7, %c0_8] : memref<4x75x392xbf16, #tpu.memory_space<vmem>>, vector<1x75x392xbf16>
    %8 = vector.shape_cast %7 : vector<1x75x392xbf16> to vector<75x392xbf16>
    %cst_9 = arith.constant dense<0.000000e+00> : vector<8x392xf32>
    %9 = tpu.matmul %0, %8, %cst_9 {dimension_numbers = #tpu.dot_dimension_numbers<[1], [0], [0], [1], [0, 0, 1, 1], [], []>} : vector<8x75xbf16>, vector<75x392xbf16>, vector<8x392xf32> -> vector<8x392xf32>
    %c3 = arith.constant 3 : index
    %c0_10 = arith.constant 0 : index
    %c0_11 = arith.constant 0 : index
    %10 = vector.load %arg1[%c3, %c0_10, %c0_11] : memref<4x75x392xbf16, #tpu.memory_space<vmem>>, vector<1x75x392xbf16>
    %11 = vector.shape_cast %10 : vector<1x75x392xbf16> to vector<75x392xbf16>
    %cst_12 = arith.constant dense<0.000000e+00> : vector<8x392xf32>
    %12 = tpu.matmul %0, %11, %cst_12 {dimension_numbers = #tpu.dot_dimension_numbers<[1], [0], [0], [1], [0, 0, 1, 1], [], []>} : vector<8x75xbf16>, vector<75x392xbf16>, vector<8x392xf32> -> vector<8x392xf32>
    %13 = arith.maximumf %3, %6 : vector<8x392xf32>
    %14 = arith.maximumf %9, %12 : vector<8x392xf32>
    %15 = arith.maximumf %13, %14 : vector<8x392xf32>
    %c0_13 = arith.constant 0 : index
    %c0_14 = arith.constant 0 : index
    %16 = vector.load %arg3[%c0_13, %c0_14] : memref<8x1xf32, #tpu.memory_space<vmem>>, vector<8x1xf32>
    %17 = vector.broadcast %16 : vector<8x1xf32> to vector<8x392xf32>
    %18 = arith.addf %15, %17 : vector<8x392xf32>
    %cst_15 = arith.constant 0.000000e+00 : f32
    %19 = vector.broadcast %cst_15 : f32 to vector<8x392xf32>
    %20 = arith.maximumf %18, %19 : vector<8x392xf32>
    %21 = arith.truncf %20 : vector<8x392xf32> to vector<8x392xbf16>
    %c0_16 = arith.constant 0 : index
    %c0_17 = arith.constant 0 : index
    %22 = vector.load %arg4[%c0_16, %c0_17] : memref<8x392xbf16, #tpu.memory_space<vmem>>, vector<8x392xbf16>
    tpu.vector_store %arg4[%c0_16, %c0_17], %21 {strides = array<i32>} : memref<8x392xbf16, #tpu.memory_space<vmem>>, vector<8x392xbf16>,
    return
  }
  func.func @transform_0(%arg0: i32) -> (i32, i32, i32) {
    %c0_i32 = arith.constant 0 : i32
    %c0_i32_0 = arith.constant 0 : i32
    %c0_i32_1 = arith.constant 0 : i32
    return %c0_i32, %c0_i32_0, %arg0 : i32, i32, i32
  }
  func.func @transform_1(%arg0: i32) -> (i32, i32) {
    %c0_i32 = arith.constant 0 : i32
    %c0_i32_0 = arith.constant 0 : i32
    %c0_i32_1 = arith.constant 0 : i32
    return %c0_i32, %c0_i32_0 : i32, i32
  }
  func.func @transform_2(%arg0: i32) -> (i32, i32) {
    %c0_i32 = arith.constant 0 : i32
    %c0_i32_0 = arith.constant 0 : i32
    %c0_i32_1 = arith.constant 0 : i32
    return %c0_i32, %c0_i32_0 : i32, i32
  }
  func.func @transform_3(%arg0: i32) -> (i32, i32) {
    %c0_i32 = arith.constant 0 : i32
    %c0_i32_0 = arith.constant 0 : i32
    return %c0_i32, %arg0 : i32, i32
  }
}

module attributes {stable_mosaic.version = 11 : i64} {
  func.func @_conv_relu_pool_kernel(%arg0: i32, %arg1: memref<4x150x50xbf16, #tpu.memory_space<vmem>>, %arg2: memref<16x150xbf16, #tpu.memory_space<vmem>>, %arg3: memref<16x1xf32, #tpu.memory_space<vmem>>, %arg4: memref<16x50xbf16, #tpu.memory_space<vmem>>) attributes {dimension_semantics = [#tpu.dimension_semantics<parallel>], iteration_bounds = array<i64: 1>, scalar_prefetch = 0 : i64, scratch_operands = 0 : i64, tpu.core_type = #tpu.core_type<tc>, window_params = [{transform_indices = @transform_0, window_bounds = array<i64: 4, 150, 50>}, {pipeline_mode = #tpu.pipeline_mode<synchronous>, transform_indices = @transform_1, window_bounds = array<i64: 16, 150>}, {pipeline_mode = #tpu.pipeline_mode<synchronous>, transform_indices = @transform_2, window_bounds = array<i64: 16, 1>}, {transform_indices = @transform_3, window_bounds = array<i64: 16, 50>}]} {
    %c0 = arith.constant 0 : index
    %c0_0 = arith.constant 0 : index
    %0 = vector.load %arg2[%c0, %c0_0] : memref<16x150xbf16, #tpu.memory_space<vmem>>, vector<16x150xbf16>
    %c0_1 = arith.constant 0 : index
    %c0_2 = arith.constant 0 : index
    %c0_3 = arith.constant 0 : index
    %1 = vector.load %arg1[%c0_1, %c0_2, %c0_3] : memref<4x150x50xbf16, #tpu.memory_space<vmem>>, vector<1x150x50xbf16>
    %2 = vector.shape_cast %1 : vector<1x150x50xbf16> to vector<150x50xbf16>
    %cst = arith.constant dense<0.000000e+00> : vector<16x50xf32>
    %3 = tpu.matmul %0, %2, %cst {dimension_numbers = #tpu.dot_dimension_numbers<[1], [0], [0], [1], [0, 0, 1, 1], [], []>} : vector<16x150xbf16>, vector<150x50xbf16>, vector<16x50xf32> -> vector<16x50xf32>
    %c1 = arith.constant 1 : index
    %c0_4 = arith.constant 0 : index
    %c0_5 = arith.constant 0 : index
    %4 = vector.load %arg1[%c1, %c0_4, %c0_5] : memref<4x150x50xbf16, #tpu.memory_space<vmem>>, vector<1x150x50xbf16>
    %5 = vector.shape_cast %4 : vector<1x150x50xbf16> to vector<150x50xbf16>
    %cst_6 = arith.constant dense<0.000000e+00> : vector<16x50xf32>
    %6 = tpu.matmul %0, %5, %cst_6 {dimension_numbers = #tpu.dot_dimension_numbers<[1], [0], [0], [1], [0, 0, 1, 1], [], []>} : vector<16x150xbf16>, vector<150x50xbf16>, vector<16x50xf32> -> vector<16x50xf32>
    %c2 = arith.constant 2 : index
    %c0_7 = arith.constant 0 : index
    %c0_8 = arith.constant 0 : index
    %7 = vector.load %arg1[%c2, %c0_7, %c0_8] : memref<4x150x50xbf16, #tpu.memory_space<vmem>>, vector<1x150x50xbf16>
    %8 = vector.shape_cast %7 : vector<1x150x50xbf16> to vector<150x50xbf16>
    %cst_9 = arith.constant dense<0.000000e+00> : vector<16x50xf32>
    %9 = tpu.matmul %0, %8, %cst_9 {dimension_numbers = #tpu.dot_dimension_numbers<[1], [0], [0], [1], [0, 0, 1, 1], [], []>} : vector<16x150xbf16>, vector<150x50xbf16>, vector<16x50xf32> -> vector<16x50xf32>
    %c3 = arith.constant 3 : index
    %c0_10 = arith.constant 0 : index
    %c0_11 = arith.constant 0 : index
    %10 = vector.load %arg1[%c3, %c0_10, %c0_11] : memref<4x150x50xbf16, #tpu.memory_space<vmem>>, vector<1x150x50xbf16>
    %11 = vector.shape_cast %10 : vector<1x150x50xbf16> to vector<150x50xbf16>
    %cst_12 = arith.constant dense<0.000000e+00> : vector<16x50xf32>
    %12 = tpu.matmul %0, %11, %cst_12 {dimension_numbers = #tpu.dot_dimension_numbers<[1], [0], [0], [1], [0, 0, 1, 1], [], []>} : vector<16x150xbf16>, vector<150x50xbf16>, vector<16x50xf32> -> vector<16x50xf32>
    %13 = arith.maximumf %3, %6 : vector<16x50xf32>
    %14 = arith.maximumf %9, %12 : vector<16x50xf32>
    %15 = arith.maximumf %13, %14 : vector<16x50xf32>
    %c0_13 = arith.constant 0 : index
    %c0_14 = arith.constant 0 : index
    %16 = vector.load %arg3[%c0_13, %c0_14] : memref<16x1xf32, #tpu.memory_space<vmem>>, vector<16x1xf32>
    %17 = vector.broadcast %16 : vector<16x1xf32> to vector<16x50xf32>
    %18 = arith.addf %15, %17 : vector<16x50xf32>
    %cst_15 = arith.constant 0.000000e+00 : f32
    %19 = vector.broadcast %cst_15 : f32 to vector<16x50xf32>
    %20 = arith.maximumf %18, %19 : vector<16x50xf32>
    %21 = arith.truncf %20 : vector<16x50xf32> to vector<16x50xbf16>
    %c0_16 = arith.constant 0 : index
    %c0_17 = arith.constant 0 : index
    %22 = vector.load %arg4[%c0_16, %c0_17] : memref<16x50xbf16, #tpu.memory_space<vmem>>, vector<16x50xbf16>
    tpu.vector_store %arg4[%c0_16, %c0_17], %21 {strides = array<i32>} : memref<16x50xbf16, #tpu.memory_space<vmem>>, vector<16x50xbf16>,
    return
  }
  func.func @transform_0(%arg0: i32) -> (i32, i32, i32) {
    %c0_i32 = arith.constant 0 : i32
    %c0_i32_0 = arith.constant 0 : i32
    %c0_i32_1 = arith.constant 0 : i32
    return %c0_i32, %c0_i32_0, %arg0 : i32, i32, i32
  }
  func.func @transform_1(%arg0: i32) -> (i32, i32) {
    %c0_i32 = arith.constant 0 : i32
    %c0_i32_0 = arith.constant 0 : i32
    %c0_i32_1 = arith.constant 0 : i32
    return %c0_i32, %c0_i32_0 : i32, i32
  }
  func.func @transform_2(%arg0: i32) -> (i32, i32) {
    %c0_i32 = arith.constant 0 : i32
    %c0_i32_0 = arith.constant 0 : i32
    %c0_i32_1 = arith.constant 0 : i32
    return %c0_i32, %c0_i32_0 : i32, i32
  }
  func.func @transform_3(%arg0: i32) -> (i32, i32) {
    %c0_i32 = arith.constant 0 : i32
    %c0_i32_0 = arith.constant 0 : i32
    return %c0_i32, %arg0 : i32, i32
  }
}

module attributes {stable_mosaic.version = 11 : i64} {
  func.func @_fc_chain_kernel(%arg0: i32, %arg1: memref<400x2xbf16, #tpu.memory_space<vmem>>, %arg2: memref<120x400xbf16, #tpu.memory_space<vmem>>, %arg3: memref<120x1xf32, #tpu.memory_space<vmem>>, %arg4: memref<84x120xf32, #tpu.memory_space<vmem>>, %arg5: memref<84x1xf32, #tpu.memory_space<vmem>>, %arg6: memref<10x84xf32, #tpu.memory_space<vmem>>, %arg7: memref<10x1xf32, #tpu.memory_space<vmem>>, %arg8: memref<10x2xf32, #tpu.memory_space<vmem>>) attributes {dimension_semantics = [#tpu.dimension_semantics<parallel>], iteration_bounds = array<i64: 1>, scalar_prefetch = 0 : i64, scratch_operands = 0 : i64, tpu.core_type = #tpu.core_type<tc>, window_params = [{transform_indices = @transform_0, window_bounds = array<i64: 400, 2>}, {pipeline_mode = #tpu.pipeline_mode<synchronous>, transform_indices = @transform_1, window_bounds = array<i64: 120, 400>}, {pipeline_mode = #tpu.pipeline_mode<synchronous>, transform_indices = @transform_2, window_bounds = array<i64: 120, 1>}, {pipeline_mode = #tpu.pipeline_mode<synchronous>, transform_indices = @transform_3, window_bounds = array<i64: 84, 120>}, {pipeline_mode = #tpu.pipeline_mode<synchronous>, transform_indices = @transform_4, window_bounds = array<i64: 84, 1>}, {pipeline_mode = #tpu.pipeline_mode<synchronous>, transform_indices = @transform_5, window_bounds = array<i64: 10, 84>}, {pipeline_mode = #tpu.pipeline_mode<synchronous>, transform_indices = @transform_6, window_bounds = array<i64: 10, 1>}, {transform_indices = @transform_7, window_bounds = array<i64: 10, 2>}]} {
    %c0 = arith.constant 0 : index
    %c0_0 = arith.constant 0 : index
    %0 = vector.load %arg2[%c0, %c0_0] : memref<120x400xbf16, #tpu.memory_space<vmem>>, vector<120x400xbf16>
    %c0_1 = arith.constant 0 : index
    %c0_2 = arith.constant 0 : index
    %1 = vector.load %arg1[%c0_1, %c0_2] : memref<400x2xbf16, #tpu.memory_space<vmem>>, vector<400x2xbf16>
    %cst = arith.constant dense<0.000000e+00> : vector<120x2xf32>
    %2 = tpu.matmul %0, %1, %cst {dimension_numbers = #tpu.dot_dimension_numbers<[1], [0], [0], [1], [0, 0, 1, 1], [], []>} : vector<120x400xbf16>, vector<400x2xbf16>, vector<120x2xf32> -> vector<120x2xf32>
    %c0_3 = arith.constant 0 : index
    %c0_4 = arith.constant 0 : index
    %3 = vector.load %arg3[%c0_3, %c0_4] : memref<120x1xf32, #tpu.memory_space<vmem>>, vector<120x1xf32>
    %4 = vector.broadcast %3 : vector<120x1xf32> to vector<120x2xf32>
    %5 = arith.addf %2, %4 : vector<120x2xf32>
    %cst_5 = arith.constant 0.000000e+00 : f32
    %6 = vector.broadcast %cst_5 : f32 to vector<120x2xf32>
    %7 = arith.maximumf %5, %6 : vector<120x2xf32>
    %c0_6 = arith.constant 0 : index
    %c0_7 = arith.constant 0 : index
    %8 = vector.load %arg4[%c0_6, %c0_7] : memref<84x120xf32, #tpu.memory_space<vmem>>, vector<84x120xf32>
    %cst_8 = arith.constant dense<0.000000e+00> : vector<84x2xf32>
    %9 = tpu.matmul %8, %7, %cst_8 {dimension_numbers = #tpu.dot_dimension_numbers<[1], [0], [0], [1], [0, 0, 1, 1], [], []>} : vector<84x120xf32>, vector<120x2xf32>, vector<84x2xf32> -> vector<84x2xf32>
    %c0_9 = arith.constant 0 : index
    %c0_10 = arith.constant 0 : index
    %10 = vector.load %arg5[%c0_9, %c0_10] : memref<84x1xf32, #tpu.memory_space<vmem>>, vector<84x1xf32>
    %11 = vector.broadcast %10 : vector<84x1xf32> to vector<84x2xf32>
    %12 = arith.addf %9, %11 : vector<84x2xf32>
    %cst_11 = arith.constant 0.000000e+00 : f32
    %13 = vector.broadcast %cst_11 : f32 to vector<84x2xf32>
    %14 = arith.maximumf %12, %13 : vector<84x2xf32>
    %c0_12 = arith.constant 0 : index
    %c0_13 = arith.constant 0 : index
    %15 = vector.load %arg6[%c0_12, %c0_13] : memref<10x84xf32, #tpu.memory_space<vmem>>, vector<10x84xf32>
    %cst_14 = arith.constant dense<0.000000e+00> : vector<10x2xf32>
    %16 = tpu.matmul %15, %14, %cst_14 {dimension_numbers = #tpu.dot_dimension_numbers<[1], [0], [0], [1], [0, 0, 1, 1], [], []>} : vector<10x84xf32>, vector<84x2xf32>, vector<10x2xf32> -> vector<10x2xf32>
    %c0_15 = arith.constant 0 : index
    %c0_16 = arith.constant 0 : index
    %17 = vector.load %arg7[%c0_15, %c0_16] : memref<10x1xf32, #tpu.memory_space<vmem>>, vector<10x1xf32>
    %18 = vector.broadcast %17 : vector<10x1xf32> to vector<10x2xf32>
    %19 = arith.addf %16, %18 : vector<10x2xf32>
    %c0_17 = arith.constant 0 : index
    %c0_18 = arith.constant 0 : index
    %20 = vector.load %arg8[%c0_17, %c0_18] : memref<10x2xf32, #tpu.memory_space<vmem>>, vector<10x2xf32>
    tpu.vector_store %arg8[%c0_17, %c0_18], %19 {strides = array<i32>} : memref<10x2xf32, #tpu.memory_space<vmem>>, vector<10x2xf32>,
    return
  }
  func.func @transform_0(%arg0: i32) -> (i32, i32) {
    %c0_i32 = arith.constant 0 : i32
    %c0_i32_0 = arith.constant 0 : i32
    return %c0_i32, %arg0 : i32, i32
  }
  func.func @transform_1(%arg0: i32) -> (i32, i32) {
    %c0_i32 = arith.constant 0 : i32
    %c0_i32_0 = arith.constant 0 : i32
    %c0_i32_1 = arith.constant 0 : i32
    return %c0_i32, %c0_i32_0 : i32, i32
  }
  func.func @transform_2(%arg0: i32) -> (i32, i32) {
    %c0_i32 = arith.constant 0 : i32
    %c0_i32_0 = arith.constant 0 : i32
    %c0_i32_1 = arith.constant 0 : i32
    return %c0_i32, %c0_i32_0 : i32, i32
  }
  func.func @transform_3(%arg0: i32) -> (i32, i32) {
    %c0_i32 = arith.constant 0 : i32
    %c0_i32_0 = arith.constant 0 : i32
    %c0_i32_1 = arith.constant 0 : i32
    return %c0_i32, %c0_i32_0 : i32, i32
  }
  func.func @transform_4(%arg0: i32) -> (i32, i32) {
    %c0_i32 = arith.constant 0 : i32
    %c0_i32_0 = arith.constant 0 : i32
    %c0_i32_1 = arith.constant 0 : i32
    return %c0_i32, %c0_i32_0 : i32, i32
  }
  func.func @transform_5(%arg0: i32) -> (i32, i32) {
    %c0_i32 = arith.constant 0 : i32
    %c0_i32_0 = arith.constant 0 : i32
    %c0_i32_1 = arith.constant 0 : i32
    return %c0_i32, %c0_i32_0 : i32, i32
  }
  func.func @transform_6(%arg0: i32) -> (i32, i32) {
    %c0_i32 = arith.constant 0 : i32
    %c0_i32_0 = arith.constant 0 : i32
    %c0_i32_1 = arith.constant 0 : i32
    return %c0_i32, %c0_i32_0 : i32, i32
  }
  func.func @transform_7(%arg0: i32) -> (i32, i32) {
    %c0_i32 = arith.constant 0 : i32
    %c0_i32_0 = arith.constant 0 : i32
    return %c0_i32, %arg0 : i32, i32
  }
}

</mosaic_0001>

<llo_original>
// kernel: cnn_forward.3
$region0: #{cnn_forward.3}
  #allocation0 [shape = 'u32[]', space=smem, size = 0x4, offset = 0x4, fixed_abs, tag = 'smem constant byte address 0x4 - core index']
  #allocation1 [shape = 'u32[144,128]{1,0:T(1,128)}', space=vmem, size = 0x12000, scoped, tag = 'internal scratch']
  %s0 = inlined_call_operand.vmem [shape: bf16[4,75,392], index: 0, kind: input, shape index: {}]
  %s1 = inlined_call_operand.vmem [shape: bf16[8,75], index: 1, kind: input, shape index: {}]
  %s2 = inlined_call_operand.vmem [shape: f32[8,1], index: 2, kind: input, shape index: {}]
  %s3 = inlined_call_operand.vmem [shape: bf16[8,392], index: 3, kind: output, shape index: {}]
  %s4 = sld [smem:[#allocation0]]
  $region22: #{cnn_forward.3} parent=0
    _
  %s6 = ssub.s32 1, %s4
  %s7 = scalar_select 0, %s6, %s4
  // Predicated region
  $region2: #{cnn_forward.3} parent=0 // pred_check
    _
  $region3: #{cnn_forward.3} parent=0 // pred_check_branch
    %9 = sbr.rel (0) target = $region5
  $region4: #{cnn_forward.3} parent=0 // pred_region
    _
  $region5: #{cnn_forward.3} parent=0 // pred_fallthru
    _
  // Predicated region
  $region6: #{cnn_forward.3} parent=0 // pred_check
    _
  $region7: #{cnn_forward.3} parent=0 // pred_check_branch
    %11 = sbr.rel (0) target = $region9
  $region8: #{cnn_forward.3} parent=0 // pred_region
    _
  $region9: #{cnn_forward.3} parent=0 // pred_fallthru
    _
  // Predicated region
  $region10: #{cnn_forward.3} parent=0 // pred_check
    _
  $region11: #{cnn_forward.3} parent=0 // pred_check_branch
    %13 = sbr.rel (0) target = $region13
  $region12: #{cnn_forward.3} parent=0 // pred_region
    _
  $region13: #{cnn_forward.3} parent=0 // pred_fallthru
    _
  %v15 = vld [vmem:[%s1] sm:$0xf]
  %v16 = vld [vmem:[%s0] sm:$0xff]
  %v17 = vld [vmem:[%s0 + $0x8] sm:$0xff]
  %v18 = vld [vmem:[%s0 + $0x10] sm:$0xff]
  %v19 = vld [vmem:[%s0 + $0x18] sm:$0xff]
  %v20 = vld [vmem:[%s0 + $0x20] sm:$0xff]
  %v21 = vld [vmem:[%s0 + $0x28] sm:$0xff]
  %v22 = vld [vmem:[%s0 + $0x30] sm:$0xff]
  %v23 = vld [vmem:[%s0 + $0x38] sm:$0xff]
  %v24 = vld [vmem:[%s0 + $0x40] sm:$0xff]
  %v25 = vld [vmem:[%s0 + $0x48] sm:$0xff]
  %v26 = vld [vmem:[%s0 + $0x50] sm:$0xff]
  %v27 = vld [vmem:[%s0 + $0x58] sm:$0xff]
  %v28 = vld [vmem:[%s0 + $0x60] sm:$0xff]
  %v29 = vld [vmem:[%s0 + $0x68] sm:$0xff]
  %v30 = vld [vmem:[%s0 + $0x70] sm:$0xff]
  %v31 = vld [vmem:[%s0 + $0x78] sm:$0xff]
  %v32 = vld [vmem:[%s0 + $0x80] sm:$0xff]
  %v33 = vld [vmem:[%s0 + $0x88] sm:$0xff]
  %v34 = vld [vmem:[%s0 + $0x90] sm:$0x33]
  %v35 = vld [vmem:[%s0 + $0x98] sm:$0x33]
  %v56 = vunpack.c.l.b16 %v16
  %v57 = vunpack.c.h.b16 %v16
  %v58 = vunpack.c.l.b16 %v17
  %v59 = vunpack.c.h.b16 %v17
  %v60 = vunpack.c.l.b16 %v18
  %v61 = vunpack.c.h.b16 %v18
  %v62 = vunpack.c.l.b16 %v19
  %v63 = vunpack.c.h.b16 %v19
  %v64 = vunpack.c.l.b16 %v20
  %v65 = vunpack.c.h.b16 %v20
  %v66 = vunpack.c.l.b16 %v21
  %v67 = vunpack.c.h.b16 %v21
  %v68 = vunpack.c.l.b16 %v22
  %v69 = vunpack.c.h.b16 %v22
  %v70 = vunpack.c.l.b16 %v23
  %v71 = vunpack.c.h.b16 %v23
  %v72 = vunpack.c.l.b16 %v24
  %v73 = vunpack.c.h.b16 %v24
  %v74 = vunpack.c.l.b16 %v25
  %v75 = vunpack.c.h.b16 %v25
  %v76 = vunpack.c.l.b16 %v26
  %v77 = vunpack.c.h.b16 %v26
  %v78 = vunpack.c.l.b16 %v27
  %v79 = vunpack.c.h.b16 %v27
  %v80 = vunpack.c.l.b16 %v28
  %v81 = vunpack.c.h.b16 %v28
  %v82 = vunpack.c.l.b16 %v29
  %v83 = vunpack.c.h.b16 %v29
  %v84 = vunpack.c.l.b16 %v30
  %v85 = vunpack.c.h.b16 %v30
  %v86 = vunpack.c.l.b16 %v31
  %v87 = vunpack.c.h.b16 %v31
  %v88 = vunpack.c.l.b16 %v32
  %v89 = vunpack.c.h.b16 %v32
  %v90 = vunpack.c.l.b16 %v33
  %v91 = vunpack.c.h.b16 %v33
  %v92 = vunpack.c.l.b16 %v34
  %v93 = vunpack.c.h.b16 %v34
  %v94 = vunpack.c.l.b16 %v35
  %v95 = vunpack.c.h.b16 %v35
  %v96 = vpack.c.b16 %v60, %v56
  %v97 = vpack.c.b16 %v61, %v57
  %v98 = vpack.c.b16 %v62, %v58
  %v99 = vpack.c.b16 %v63, %v59
  %v100 = vpack.c.b16 %v68, %v64
  %v101 = vpack.c.b16 %v69, %v65
  %v102 = vpack.c.b16 %v70, %v66
  %v103 = vpack.c.b16 %v71, %v67
  %v104 = vpack.c.b16 %v76, %v72
  %v105 = vpack.c.b16 %v77, %v73
  %v106 = vpack.c.b16 %v78, %v74
  %v107 = vpack.c.b16 %v79, %v75
  %v108 = vpack.c.b16 %v84, %v80
  %v109 = vpack.c.b16 %v85, %v81
  %v110 = vpack.c.b16 %v86, %v82
  %v111 = vpack.c.b16 %v87, %v83
  %v112 = vpack.c.b16 %v92, %v88
  %v113 = vpack.c.b16 %v93, %v89
  %v114 = vpack.c.b16 %v94, %v90
  %v115 = vpack.c.b16 %v95, %v91
  %vm132 = vcmask 613376
  %v134 = vsel %vm132, %v15, 0
  %vm136 = vcmask 1044480
  %vm137 = vcmask 1045504
  %v138 = vsel %vm136, 4294967295, 65535
  %v139 = vsel %vm137, %v138, 0
  %v141 = vand.u32 %v112, %v139
  %v144 = vand.u32 %v113, %v139
  %v147 = vand.u32 %v114, %v139
  %v150 = vand.u32 %v115, %v139
  %152 = vmatprep.subr.bf16.mxu0 0
  %153 = vmatpush1.bf16.msra.mxu0 0
  %154 = vmatprep.subr.bf16.mxu0 0
  %155 = vmatpush1.bf16.msra.mxu0 0
  %156 = vmatprep.subr.bf16.mxu0 0
  %157 = vmatpush1.bf16.msra.mxu0 0
  %158 = vmatprep.subr.bf16.mxu0 %v144
  %159 = vmatpush1.bf16.msra.mxu0 %v141
  %160 = vmatprep.subr.bf16.mxu0 %v109
  %161 = vmatpush1.bf16.msra.mxu0 %v108
  %162 = vmatprep.subr.bf16.mxu0 %v105
  %163 = vmatpush1.bf16.msra.mxu0 %v104
  %164 = vmatprep.subr.bf16.mxu0 %v101
  %165 = vmatpush1.bf16.msra.mxu0 %v100
  %166 = vmatprep.subr.bf16.mxu0 %v97
  %167 = vmatpush1.bf16.msra.mxu0 %v96
  %168 = vmatprep.subr.bf16.mxu0 0
  %169 = vmatpush2.bf16.msra.mxu0 0
  %170 = vmatprep.subr.bf16.mxu0 0
  %171 = vmatpush2.bf16.msra.mxu0 0
  %172 = vmatprep.subr.bf16.mxu0 0
  %173 = vmatpush2.bf16.msra.mxu0 0
  %174 = vmatprep.subr.bf16.mxu0 0
  %175 = vmatpush2.bf16.msra.mxu0 0
  %176 = vmatprep.subr.bf16.mxu0 0
  %177 = vmatpush2.bf16.msra.mxu0 0
  %178 = vmatprep.subr.bf16.mxu0 0
  %179 = vmatpush2.bf16.msra.mxu0 0
  %180 = vmatprep.subr.bf16.mxu0 0
  %181 = vmatpush2.bf16.msra.mxu0 0
  %182 = vmatprep.subr.bf16.mxu0 0
  %183 = vmatpush2.bf16.msra.mxu0 0
  %184 = vmatprep.mubr.bf16.mxu0 0
  %185 = vmatmul.mubr.bf16.gmra.mxu0 %v134
  %v186 = vpop.f32.mrf.mxu0
  %v187 = vadd.f32 0.0, %v186
  %v188 = vpop.f32.mrf.mxu0
  %v189 = vadd.f32 0.0, %v188
  %v190 = vpop.f32.mrf.mxu0
  %v191 = vpop.f32.mrf.mxu0
  %192 = vdwg.mxu0
  %193 = vmatprep.subr.bf16.mxu0 0
  %194 = vmatpush1.bf16.msra.mxu0 0
  %195 = vmatprep.subr.bf16.mxu0 0
  %196 = vmatpush1.bf16.msra.mxu0 0
  %197 = vmatprep.subr.bf16.mxu0 0
  %198 = vmatpush1.bf16.msra.mxu0 0
  %199 = vmatprep.subr.bf16.mxu0 %v150
  %200 = vmatpush1.bf16.msra.mxu0 %v147
  %201 = vmatprep.subr.bf16.mxu0 %v111
  %202 = vmatpush1.bf16.msra.mxu0 %v110
  %203 = vmatprep.subr.bf16.mxu0 %v107
  %204 = vmatpush1.bf16.msra.mxu0 %v106
  %205 = vmatprep.subr.bf16.mxu0 %v103
  %206 = vmatpush1.bf16.msra.mxu0 %v102
  %207 = vmatprep.subr.bf16.mxu0 %v99
  %208 = vmatpush1.bf16.msra.mxu0 %v98
  %209 = vmatprep.subr.bf16.mxu0 0
  %210 = vmatpush2.bf16.msra.mxu0 0
  %211 = vmatprep.subr.bf16.mxu0 0
  %212 = vmatpush2.bf16.msra.mxu0 0
  %213 = vmatprep.subr.bf16.mxu0 0
  %214 = vmatpush2.bf16.msra.mxu0 0
  %215 = vmatprep.subr.bf16.mxu0 0
  %216 = vmatpush2.bf16.msra.mxu0 0
  %217 = vmatprep.subr.bf16.mxu0 0
  %218 = vmatpush2.bf16.msra.mxu0 0
  %219 = vmatprep.subr.bf16.mxu0 0
  %220 = vmatpush2.bf16.msra.mxu0 0
  %221 = vmatprep.subr.bf16.mxu0 0
  %222 = vmatpush2.bf16.msra.mxu0 0
  %223 = vmatprep.subr.bf16.mxu0 0
  %224 = vmatpush2.bf16.msra.mxu0 0
  %225 = vmatprep.mubr.bf16.mxu0 0
  %226 = vmatmul.mubr.bf16.gmra.mxu0 %v134
  %v227 = vpop.f32.mrf.mxu0
  %v228 = vadd.f32 0.0, %v227
  %v229 = vpop.f32.mrf.mxu0
  %v230 = vadd.f32 0.0, %v229
  %v231 = vpop.f32.mrf.mxu0
  %v232 = vpop.f32.mrf.mxu0
  %233 = vdwg.mxu0
  %s234 = scalar_lea.vmem %s0, 160
  %v235 = vld [vmem:[%s234] sm:$0xff]
  %v236 = vld [vmem:[%s234 + $0x8] sm:$0xff]
  %v237 = vld [vmem:[%s234 + $0x10] sm:$0xff]
  %v238 = vld [vmem:[%s234 + $0x18] sm:$0xff]
  %v239 = vld [vmem:[%s234 + $0x20] sm:$0xff]
  %v240 = vld [vmem:[%s234 + $0x28] sm:$0xff]
  %v241 = vld [vmem:[%s234 + $0x30] sm:$0xff]
  %v242 = vld [vmem:[%s234 + $0x38] sm:$0xff]
  %v243 = vld [vmem:[%s234 + $0x40] sm:$0xff]
  %v244 = vld [vmem:[%s234 + $0x48] sm:$0xff]
  %v245 = vld [vmem:[%s234 + $0x50] sm:$0xff]
  %v246 = vld [vmem:[%s234 + $0x58] sm:$0xff]
  %v247 = vld [vmem:[%s234 + $0x60] sm:$0xff]
  %v248 = vld [vmem:[%s234 + $0x68] sm:$0xff]
  %v249 = vld [vmem:[%s234 + $0x70] sm:$0xff]
  %v250 = vld [vmem:[%s234 + $0x78] sm:$0xff]
  %v251 = vld [vmem:[%s234 + $0x80] sm:$0xff]
  %v252 = vld [vmem:[%s234 + $0x88] sm:$0xff]
  %v253 = vld [vmem:[%s234 + $0x90] sm:$0x33]
  %v254 = vld [vmem:[%s234 + $0x98] sm:$0x33]
  %v275 = vunpack.c.l.b16 %v235
  %v276 = vunpack.c.h.b16 %v235
  %v277 = vunpack.c.l.b16 %v236
  %v278 = vunpack.c.h.b16 %v236
  %v279 = vunpack.c.l.b16 %v237
  %v280 = vunpack.c.h.b16 %v237
  %v281 = vunpack.c.l.b16 %v238
  %v282 = vunpack.c.h.b16 %v238
  %v283 = vunpack.c.l.b16 %v239
  %v284 = vunpack.c.h.b16 %v239
  %v285 = vunpack.c.l.b16 %v240
  %v286 = vunpack.c.h.b16 %v240
  %v287 = vunpack.c.l.b16 %v241
  %v288 = vunpack.c.h.b16 %v241
  %v289 = vunpack.c.l.b16 %v242
  %v290 = vunpack.c.h.b16 %v242
  %v291 = vunpack.c.l.b16 %v243
  %v292 = vunpack.c.h.b16 %v243
  %v293 = vunpack.c.l.b16 %v244
  %v294 = vunpack.c.h.b16 %v244
  %v295 = vunpack.c.l.b16 %v245
  %v296 = vunpack.c.h.b16 %v245
  %v297 = vunpack.c.l.b16 %v246
  %v298 = vunpack.c.h.b16 %v246
  %v299 = vunpack.c.l.b16 %v247
  %v300 = vunpack.c.h.b16 %v247
  %v301 = vunpack.c.l.b16 %v248
  %v302 = vunpack.c.h.b16 %v248
  %v303 = vunpack.c.l.b16 %v249
  %v304 = vunpack.c.h.b16 %v249
  %v305 = vunpack.c.l.b16 %v250
  %v306 = vunpack.c.h.b16 %v250
  %v307 = vunpack.c.l.b16 %v251
  %v308 = vunpack.c.h.b16 %v251
  %v309 = vunpack.c.l.b16 %v252
  %v310 = vunpack.c.h.b16 %v252
  %v311 = vunpack.c.l.b16 %v253
  %v312 = vunpack.c.h.b16 %v253
  %v313 = vunpack.c.l.b16 %v254
  %v314 = vunpack.c.h.b16 %v254
  %v315 = vpack.c.b16 %v279, %v275
  %v316 = vpack.c.b16 %v280, %v276
  %v317 = vpack.c.b16 %v281, %v277
  %v318 = vpack.c.b16 %v282, %v278
  %v319 = vpack.c.b16 %v287, %v283
  %v320 = vpack.c.b16 %v288, %v284
  %v321 = vpack.c.b16 %v289, %v285
  %v322 = vpack.c.b16 %v290, %v286
  %v323 = vpack.c.b16 %v295, %v291
  %v324 = vpack.c.b16 %v296, %v292
  %v325 = vpack.c.b16 %v297, %v293
  %v326 = vpack.c.b16 %v298, %v294
  %v327 = vpack.c.b16 %v303, %v299
  %v328 = vpack.c.b16 %v304, %v300
  %v329 = vpack.c.b16 %v305, %v301
  %v330 = vpack.c.b16 %v306, %v302
  %v331 = vpack.c.b16 %v311, %v307
  %v332 = vpack.c.b16 %v312, %v308
  %v333 = vpack.c.b16 %v313, %v309
  %v334 = vpack.c.b16 %v314, %v310
  %v352 = vand.u32 %v331, %v139
  %v355 = vand.u32 %v332, %v139
  %v358 = vand.u32 %v333, %v139
  %v361 = vand.u32 %v334, %v139
  %363 = vmatprep.subr.bf16.mxu0 0
  %364 = vmatpush1.bf16.msra.mxu0 0
  %365 = vmatprep.subr.bf16.mxu0 0
  %366 = vmatpush1.bf16.msra.mxu0 0
  %367 = vmatprep.subr.bf16.mxu0 0
  %368 = vmatpush1.bf16.msra.mxu0 0
  %369 = vmatprep.subr.bf16.mxu0 %v355
  %370 = vmatpush1.bf16.msra.mxu0 %v352
  %371 = vmatprep.subr.bf16.mxu0 %v328
  %372 = vmatpush1.bf16.msra.mxu0 %v327
  %373 = vmatprep.subr.bf16.mxu0 %v324
  %374 = vmatpush1.bf16.msra.mxu0 %v323
  %375 = vmatprep.subr.bf16.mxu0 %v320
  %376 = vmatpush1.bf16.msra.mxu0 %v319
  %377 = vmatprep.subr.bf16.mxu0 %v316
  %378 = vmatpush1.bf16.msra.mxu0 %v315
  %379 = vmatprep.subr.bf16.mxu0 0
  %380 = vmatpush2.bf16.msra.mxu0 0
  %381 = vmatprep.subr.bf16.mxu0 0
  %382 = vmatpush2.bf16.msra.mxu0 0
  %383 = vmatprep.subr.bf16.mxu0 0
  %384 = vmatpush2.bf16.msra.mxu0 0
  %385 = vmatprep.subr.bf16.mxu0 0
  %386 = vmatpush2.bf16.msra.mxu0 0
  %387 = vmatprep.subr.bf16.mxu0 0
  %388 = vmatpush2.bf16.msra.mxu0 0
  %389 = vmatprep.subr.bf16.mxu0 0
  %390 = vmatpush2.bf16.msra.mxu0 0
  %391 = vmatprep.subr.bf16.mxu0 0
  %392 = vmatpush2.bf16.msra.mxu0 0
  %393 = vmatprep.subr.bf16.mxu0 0
  %394 = vmatpush2.bf16.msra.mxu0 0
  %395 = vmatprep.mubr.bf16.mxu0 0
  %396 = vmatmul.mubr.bf16.gmra.mxu0 %v134
  %v397 = vpop.f32.mrf.mxu0
  %v398 = vadd.f32 0.0, %v397
  %v399 = vpop.f32.mrf.mxu0
  %v400 = vadd.f32 0.0, %v399
  %v401 = vpop.f32.mrf.mxu0
  %v402 = vpop.f32.mrf.mxu0
  %403 = vdwg.mxu0
  %404 = vmatprep.subr.bf16.mxu0 0
  %405 = vmatpush1.bf16.msra.mxu0 0
  %406 = vmatprep.subr.bf16.mxu0 0
  %407 = vmatpush1.bf16.msra.mxu0 0
  %408 = vmatprep.subr.bf16.mxu0 0
  %409 = vmatpush1.bf16.msra.mxu0 0
  %410 = vmatprep.subr.bf16.mxu0 %v361
  %411 = vmatpush1.bf16.msra.mxu0 %v358
  %412 = vmatprep.subr.bf16.mxu0 %v330
  %413 = vmatpush1.bf16.msra.mxu0 %v329
  %414 = vmatprep.subr.bf16.mxu0 %v326
  %415 = vmatpush1.bf16.msra.mxu0 %v325
  %416 = vmatprep.subr.bf16.mxu0 %v322
  %417 = vmatpush1.bf16.msra.mxu0 %v321
  %418 = vmatprep.subr.bf16.mxu0 %v318
  %419 = vmatpush1.bf16.msra.mxu0 %v317
  %420 = vmatprep.subr.bf16.mxu0 0
  %421 = vmatpush2.bf16.msra.mxu0 0
  %422 = vmatprep.subr.bf16.mxu0 0
  %423 = vmatpush2.bf16.msra.mxu0 0
  %424 = vmatprep.subr.bf16.mxu0 0
  %425 = vmatpush2.bf16.msra.mxu0 0
  %426 = vmatprep.subr.bf16.mxu0 0
  %427 = vmatpush2.bf16.msra.mxu0 0
  %428 = vmatprep.subr.bf16.mxu0 0
  %429 = vmatpush2.bf16.msra.mxu0 0
  %430 = vmatprep.subr.bf16.mxu0 0
  %431 = vmatpush2.bf16.msra.mxu0 0
  %432 = vmatprep.subr.bf16.mxu0 0
  %433 = vmatpush2.bf16.msra.mxu0 0
  %434 = vmatprep.subr.bf16.mxu0 0
  %435 = vmatpush2.bf16.msra.mxu0 0
  %436 = vmatprep.mubr.bf16.mxu0 0
  %437 = vmatmul.mubr.bf16.gmra.mxu0 %v134
  %v438 = vpop.f32.mrf.mxu0
  %v439 = vadd.f32 0.0, %v438
  %v440 = vpop.f32.mrf.mxu0
  %v441 = vadd.f32 0.0, %v440
  %v442 = vpop.f32.mrf.mxu0
  %v443 = vpop.f32.mrf.mxu0
  %444 = vdwg.mxu0
  %s445 = scalar_lea.vmem %s0, 320
  %v446 = vld [vmem:[%s445] sm:$0xff]
  %v447 = vld [vmem:[%s445 + $0x8] sm:$0xff]
  %v448 = vld [vmem:[%s445 + $0x10] sm:$0xff]
  %v449 = vld [vmem:[%s445 + $0x18] sm:$0xff]
  %v450 = vld [vmem:[%s445 + $0x20] sm:$0xff]
  %v451 = vld [vmem:[%s445 + $0x28] sm:$0xff]
  %v452 = vld [vmem:[%s445 + $0x30] sm:$0xff]
  %v453 = vld [vmem:[%s445 + $0x38] sm:$0xff]
  %v454 = vld [vmem:[%s445 + $0x40] sm:$0xff]
  %v455 = vld [vmem:[%s445 + $0x48] sm:$0xff]
  %v456 = vld [vmem:[%s445 + $0x50] sm:$0xff]
  %v457 = vld [vmem:[%s445 + $0x58] sm:$0xff]
  %v458 = vld [vmem:[%s445 + $0x60] sm:$0xff]
  %v459 = vld [vmem:[%s445 + $0x68] sm:$0xff]
  %v460 = vld [vmem:[%s445 + $0x70] sm:$0xff]
  %v461 = vld [vmem:[%s445 + $0x78] sm:$0xff]
  %v462 = vld [vmem:[%s445 + $0x80] sm:$0xff]
  %v463 = vld [vmem:[%s445 + $0x88] sm:$0xff]
  %v464 = vld [vmem:[%s445 + $0x90] sm:$0x33]
  %v465 = vld [vmem:[%s445 + $0x98] sm:$0x33]
  %v486 = vunpack.c.l.b16 %v446
  %v487 = vunpack.c.h.b16 %v446
  %v488 = vunpack.c.l.b16 %v447
  %v489 = vunpack.c.h.b16 %v447
  %v490 = vunpack.c.l.b16 %v448
  %v491 = vunpack.c.h.b16 %v448
  %v492 = vunpack.c.l.b16 %v449
  %v493 = vunpack.c.h.b16 %v449
  %v494 = vunpack.c.l.b16 %v450
  %v495 = vunpack.c.h.b16 %v450
  %v496 = vunpack.c.l.b16 %v451
  %v497 = vunpack.c.h.b16 %v451
  %v498 = vunpack.c.l.b16 %v452
  %v499 = vunpack.c.h.b16 %v452
  %v500 = vunpack.c.l.b16 %v453
  %v501 = vunpack.c.h.b16 %v453
  %v502 = vunpack.c.l.b16 %v454
  %v503 = vunpack.c.h.b16 %v454
  %v504 = vunpack.c.l.b16 %v455
  %v505 = vunpack.c.h.b16 %v455
  %v506 = vunpack.c.l.b16 %v456
  %v507 = vunpack.c.h.b16 %v456
  %v508 = vunpack.c.l.b16 %v457
  %v509 = vunpack.c.h.b16 %v457
  %v510 = vunpack.c.l.b16 %v458
  %v511 = vunpack.c.h.b16 %v458
  %v512 = vunpack.c.l.b16 %v459
  %v513 = vunpack.c.h.b16 %v459
  %v514 = vunpack.c.l.b16 %v460
  %v515 = vunpack.c.h.b16 %v460
  %v516 = vunpack.c.l.b16 %v461
  %v517 = vunpack.c.h.b16 %v461
  %v518 = vunpack.c.l.b16 %v462
  %v519 = vunpack.c.h.b16 %v462
  %v520 = vunpack.c.l.b16 %v463
  %v521 = vunpack.c.h.b16 %v463
  %v522 = vunpack.c.l.b16 %v464
  %v523 = vunpack.c.h.b16 %v464
  %v524 = vunpack.c.l.b16 %v465
  %v525 = vunpack.c.h.b16 %v465
  %v526 = vpack.c.b16 %v490, %v486
  %v527 = vpack.c.b16 %v491, %v487
  %v528 = vpack.c.b16 %v492, %v488
  %v529 = vpack.c.b16 %v493, %v489
  %v530 = vpack.c.b16 %v498, %v494
  %v531 = vpack.c.b16 %v499, %v495
  %v532 = vpack.c.b16 %v500, %v496
  %v533 = vpack.c.b16 %v501, %v497
  %v534 = vpack.c.b16 %v506, %v502
  %v535 = vpack.c.b16 %v507, %v503
  %v536 = vpack.c.b16 %v508, %v504
  %v537 = vpack.c.b16 %v509, %v505
  %v538 = vpack.c.b16 %v514, %v510
  %v539 = vpack.c.b16 %v515, %v511
  %v540 = vpack.c.b16 %v516, %v512
  %v541 = vpack.c.b16 %v517, %v513
  %v542 = vpack.c.b16 %v522, %v518
  %v543 = vpack.c.b16 %v523, %v519
  %v544 = vpack.c.b16 %v524, %v520
  %v545 = vpack.c.b16 %v525, %v521
  %v563 = vand.u32 %v542, %v139
  %v566 = vand.u32 %v543, %v139
  %v569 = vand.u32 %v544, %v139
  %v572 = vand.u32 %v545, %v139
  %574 = vmatprep.subr.bf16.mxu0 0
  %575 = vmatpush1.bf16.msra.mxu0 0
  %576 = vmatprep.subr.bf16.mxu0 0
  %577 = vmatpush1.bf16.msra.mxu0 0
  %578 = vmatprep.subr.bf16.mxu0 0
  %579 = vmatpush1.bf16.msra.mxu0 0
  %580 = vmatprep.subr.bf16.mxu0 %v566
  %581 = vmatpush1.bf16.msra.mxu0 %v563
  %582 = vmatprep.subr.bf16.mxu0 %v539
  %583 = vmatpush1.bf16.msra.mxu0 %v538
  %584 = vmatprep.subr.bf16.mxu0 %v535
  %585 = vmatpush1.bf16.msra.mxu0 %v534
  %586 = vmatprep.subr.bf16.mxu0 %v531
  %587 = vmatpush1.bf16.msra.mxu0 %v530
  %588 = vmatprep.subr.bf16.mxu0 %v527
  %589 = vmatpush1.bf16.msra.mxu0 %v526
  %590 = vmatprep.subr.bf16.mxu0 0
  %591 = vmatpush2.bf16.msra.mxu0 0
  %592 = vmatprep.subr.bf16.mxu0 0
  %593 = vmatpush2.bf16.msra.mxu0 0
  %594 = vmatprep.subr.bf16.mxu0 0
  %595 = vmatpush2.bf16.msra.mxu0 0
  %596 = vmatprep.subr.bf16.mxu0 0
  %597 = vmatpush2.bf16.msra.mxu0 0
  %598 = vmatprep.subr.bf16.mxu0 0
  %599 = vmatpush2.bf16.msra.mxu0 0
  %600 = vmatprep.subr.bf16.mxu0 0
  %601 = vmatpush2.bf16.msra.mxu0 0
  %602 = vmatprep.subr.bf16.mxu0 0
  %603 = vmatpush2.bf16.msra.mxu0 0
  %604 = vmatprep.subr.bf16.mxu0 0
  %605 = vmatpush2.bf16.msra.mxu0 0
  %606 = vmatprep.mubr.bf16.mxu0 0
  %607 = vmatmul.mubr.bf16.gmra.mxu0 %v134
  %v608 = vpop.f32.mrf.mxu0
  %v609 = vadd.f32 0.0, %v608
  %v610 = vpop.f32.mrf.mxu0
  %v611 = vadd.f32 0.0, %v610
  %v612 = vpop.f32.mrf.mxu0
  %v613 = vpop.f32.mrf.mxu0
  %614 = vdwg.mxu0
  %615 = vmatprep.subr.bf16.mxu0 0
  %616 = vmatpush1.bf16.msra.mxu0 0
  %617 = vmatprep.subr.bf16.mxu0 0
  %618 = vmatpush1.bf16.msra.mxu0 0
  %619 = vmatprep.subr.bf16.mxu0 0
  %620 = vmatpush1.bf16.msra.mxu0 0
  %621 = vmatprep.subr.bf16.mxu0 %v572
  %622 = vmatpush1.bf16.msra.mxu0 %v569
  %623 = vmatprep.subr.bf16.mxu0 %v541
  %624 = vmatpush1.bf16.msra.mxu0 %v540
  %625 = vmatprep.subr.bf16.mxu0 %v537
  %626 = vmatpush1.bf16.msra.mxu0 %v536
  %627 = vmatprep.subr.bf16.mxu0 %v533
  %628 = vmatpush1.bf16.msra.mxu0 %v532
  %629 = vmatprep.subr.bf16.mxu0 %v529
  %630 = vmatpush1.bf16.msra.mxu0 %v528
  %631 = vmatprep.subr.bf16.mxu0 0
  %632 = vmatpush2.bf16.msra.mxu0 0
  %633 = vmatprep.subr.bf16.mxu0 0
  %634 = vmatpush2.bf16.msra.mxu0 0
  %635 = vmatprep.subr.bf16.mxu0 0
  %636 = vmatpush2.bf16.msra.mxu0 0
  %637 = vmatprep.subr.bf16.mxu0 0
  %638 = vmatpush2.bf16.msra.mxu0 0
  %639 = vmatprep.subr.bf16.mxu0 0
  %640 = vmatpush2.bf16.msra.mxu0 0
  %641 = vmatprep.subr.bf16.mxu0 0
  %642 = vmatpush2.bf16.msra.mxu0 0
  %643 = vmatprep.subr.bf16.mxu0 0
  %644 = vmatpush2.bf16.msra.mxu0 0
  %645 = vmatprep.subr.bf16.mxu0 0
  %646 = vmatpush2.bf16.msra.mxu0 0
  %647 = vmatprep.mubr.bf16.mxu0 0
  %648 = vmatmul.mubr.bf16.gmra.mxu0 %v134
  %v649 = vpop.f32.mrf.mxu0
  %v650 = vadd.f32 0.0, %v649
  %v651 = vpop.f32.mrf.mxu0
  %v652 = vadd.f32 0.0, %v651
  %v653 = vpop.f32.mrf.mxu0
  %v654 = vpop.f32.mrf.mxu0
  %655 = vdwg.mxu0
  %s656 = scalar_lea.vmem %s0, 480
  %v657 = vld [vmem:[%s656] sm:$0xff]
  %v658 = vld [vmem:[%s656 + $0x8] sm:$0xff]
  %v659 = vld [vmem:[%s656 + $0x10] sm:$0xff]
  %v660 = vld [vmem:[%s656 + $0x18] sm:$0xff]
  %v661 = vld [vmem:[%s656 + $0x20] sm:$0xff]
  %v662 = vld [vmem:[%s656 + $0x28] sm:$0xff]
  %v663 = vld [vmem:[%s656 + $0x30] sm:$0xff]
  %v664 = vld [vmem:[%s656 + $0x38] sm:$0xff]
  %v665 = vld [vmem:[%s656 + $0x40] sm:$0xff]
  %v666 = vld [vmem:[%s656 + $0x48] sm:$0xff]
  %v667 = vld [vmem:[%s656 + $0x50] sm:$0xff]
  %v668 = vld [vmem:[%s656 + $0x58] sm:$0xff]
  %v669 = vld [vmem:[%s656 + $0x60] sm:$0xff]
  %v670 = vld [vmem:[%s656 + $0x68] sm:$0xff]
  %v671 = vld [vmem:[%s656 + $0x70] sm:$0xff]
  %v672 = vld [vmem:[%s656 + $0x78] sm:$0xff]
  %v673 = vld [vmem:[%s656 + $0x80] sm:$0xff]
  %v674 = vld [vmem:[%s656 + $0x88] sm:$0xff]
  %v675 = vld [vmem:[%s656 + $0x90] sm:$0x33]
  %v676 = vld [vmem:[%s656 + $0x98] sm:$0x33]
  %v697 = vunpack.c.l.b16 %v657
  %v698 = vunpack.c.h.b16 %v657
  %v699 = vunpack.c.l.b16 %v658
  %v700 = vunpack.c.h.b16 %v658
  %v701 = vunpack.c.l.b16 %v659
  %v702 = vunpack.c.h.b16 %v659
  %v703 = vunpack.c.l.b16 %v660
  %v704 = vunpack.c.h.b16 %v660
  %v705 = vunpack.c.l.b16 %v661
  %v706 = vunpack.c.h.b16 %v661
  %v707 = vunpack.c.l.b16 %v662
  %v708 = vunpack.c.h.b16 %v662
  %v709 = vunpack.c.l.b16 %v663
  %v710 = vunpack.c.h.b16 %v663
  %v711 = vunpack.c.l.b16 %v664
  %v712 = vunpack.c.h.b16 %v664
  %v713 = vunpack.c.l.b16 %v665
  %v714 = vunpack.c.h.b16 %v665
  %v715 = vunpack.c.l.b16 %v666
  %v716 = vunpack.c.h.b16 %v666
  %v717 = vunpack.c.l.b16 %v667
  %v718 = vunpack.c.h.b16 %v667
  %v719 = vunpack.c.l.b16 %v668
  %v720 = vunpack.c.h.b16 %v668
  %v721 = vunpack.c.l.b16 %v669
  %v722 = vunpack.c.h.b16 %v669
  %v723 = vunpack.c.l.b16 %v670
  %v724 = vunpack.c.h.b16 %v670
  %v725 = vunpack.c.l.b16 %v671
  %v726 = vunpack.c.h.b16 %v671
  %v727 = vunpack.c.l.b16 %v672
  %v728 = vunpack.c.h.b16 %v672
  %v729 = vunpack.c.l.b16 %v673
  %v730 = vunpack.c.h.b16 %v673
  %v731 = vunpack.c.l.b16 %v674
  %v732 = vunpack.c.h.b16 %v674
  %v733 = vunpack.c.l.b16 %v675
  %v734 = vunpack.c.h.b16 %v675
  %v735 = vunpack.c.l.b16 %v676
  %v736 = vunpack.c.h.b16 %v676
  %v737 = vpack.c.b16 %v701, %v697
  %v738 = vpack.c.b16 %v702, %v698
  %v739 = vpack.c.b16 %v703, %v699
  %v740 = vpack.c.b16 %v704, %v700
  %v741 = vpack.c.b16 %v709, %v705
  %v742 = vpack.c.b16 %v710, %v706
  %v743 = vpack.c.b16 %v711, %v707
  %v744 = vpack.c.b16 %v712, %v708
  %v745 = vpack.c.b16 %v717, %v713
  %v746 = vpack.c.b16 %v718, %v714
  %v747 = vpack.c.b16 %v719, %v715
  %v748 = vpack.c.b16 %v720, %v716
  %v749 = vpack.c.b16 %v725, %v721
  %v750 = vpack.c.b16 %v726, %v722
  %v751 = vpack.c.b16 %v727, %v723
  %v752 = vpack.c.b16 %v728, %v724
  %v753 = vpack.c.b16 %v733, %v729
  %v754 = vpack.c.b16 %v734, %v730
  %v755 = vpack.c.b16 %v735, %v731
  %v756 = vpack.c.b16 %v736, %v732
  %v774 = vand.u32 %v753, %v139
  %v777 = vand.u32 %v754, %v139
  %v780 = vand.u32 %v755, %v139
  %v783 = vand.u32 %v756, %v139
  %785 = vmatprep.subr.bf16.mxu0 0
  %786 = vmatpush1.bf16.msra.mxu0 0
  %787 = vmatprep.subr.bf16.mxu0 0
  %788 = vmatpush1.bf16.msra.mxu0 0
  %789 = vmatprep.subr.bf16.mxu0 0
  %790 = vmatpush1.bf16.msra.mxu0 0
  %791 = vmatprep.subr.bf16.mxu0 %v777
  %792 = vmatpush1.bf16.msra.mxu0 %v774
  %793 = vmatprep.subr.bf16.mxu0 %v750
  %794 = vmatpush1.bf16.msra.mxu0 %v749
  %795 = vmatprep.subr.bf16.mxu0 %v746
  %796 = vmatpush1.bf16.msra.mxu0 %v745
  %797 = vmatprep.subr.bf16.mxu0 %v742
  %798 = vmatpush1.bf16.msra.mxu0 %v741
  %799 = vmatprep.subr.bf16.mxu0 %v738
  %800 = vmatpush1.bf16.msra.mxu0 %v737
  %801 = vmatprep.subr.bf16.mxu0 0
  %802 = vmatpush2.bf16.msra.mxu0 0
  %803 = vmatprep.subr.bf16.mxu0 0
  %804 = vmatpush2.bf16.msra.mxu0 0
  %805 = vmatprep.subr.bf16.mxu0 0
  %806 = vmatpush2.bf16.msra.mxu0 0
  %807 = vmatprep.subr.bf16.mxu0 0
  %808 = vmatpush2.bf16.msra.mxu0 0
  %809 = vmatprep.subr.bf16.mxu0 0
  %810 = vmatpush2.bf16.msra.mxu0 0
  %811 = vmatprep.subr.bf16.mxu0 0
  %812 = vmatpush2.bf16.msra.mxu0 0
  %813 = vmatprep.subr.bf16.mxu0 0
  %814 = vmatpush2.bf16.msra.mxu0 0
  %815 = vmatprep.subr.bf16.mxu0 0
  %816 = vmatpush2.bf16.msra.mxu0 0
  %817 = vmatprep.mubr.bf16.mxu0 0
  %818 = vmatmul.mubr.bf16.gmra.mxu0 %v134
  %v819 = vpop.f32.mrf.mxu0
  %v820 = vadd.f32 0.0, %v819
  %v821 = vpop.f32.mrf.mxu0
  %v822 = vadd.f32 0.0, %v821
  %v823 = vpop.f32.mrf.mxu0
  %v824 = vpop.f32.mrf.mxu0
  %825 = vdwg.mxu0
  %826 = vmatprep.subr.bf16.mxu0 0
  %827 = vmatpush1.bf16.msra.mxu0 0
  %828 = vmatprep.subr.bf16.mxu0 0
  %829 = vmatpush1.bf16.msra.mxu0 0
  %830 = vmatprep.subr.bf16.mxu0 0
  %831 = vmatpush1.bf16.msra.mxu0 0
  %832 = vmatprep.subr.bf16.mxu0 %v783
  %833 = vmatpush1.bf16.msra.mxu0 %v780
  %834 = vmatprep.subr.bf16.mxu0 %v752
  %835 = vmatpush1.bf16.msra.mxu0 %v751
  %836 = vmatprep.subr.bf16.mxu0 %v748
  %837 = vmatpush1.bf16.msra.mxu0 %v747
  %838 = vmatprep.subr.bf16.mxu0 %v744
  %839 = vmatpush1.bf16.msra.mxu0 %v743
  %840 = vmatprep.subr.bf16.mxu0 %v740
  %841 = vmatpush1.bf16.msra.mxu0 %v739
  %842 = vmatprep.subr.bf16.mxu0 0
  %843 = vmatpush2.bf16.msra.mxu0 0
  %844 = vmatprep.subr.bf16.mxu0 0
  %845 = vmatpush2.bf16.msra.mxu0 0
  %846 = vmatprep.subr.bf16.mxu0 0
  %847 = vmatpush2.bf16.msra.mxu0 0
  %848 = vmatprep.subr.bf16.mxu0 0
  %849 = vmatpush2.bf16.msra.mxu0 0
  %850 = vmatprep.subr.bf16.mxu0 0
  %851 = vmatpush2.bf16.msra.mxu0 0
  %852 = vmatprep.subr.bf16.mxu0 0
  %853 = vmatpush2.bf16.msra.mxu0 0
  %854 = vmatprep.subr.bf16.mxu0 0
  %855 = vmatpush2.bf16.msra.mxu0 0
  %856 = vmatprep.subr.bf16.mxu0 0
  %857 = vmatpush2.bf16.msra.mxu0 0
  %858 = vmatprep.mubr.bf16.mxu0 0
  %859 = vmatmul.mubr.bf16.gmra.mxu0 %v134
  %v860 = vpop.f32.mrf.mxu0
  %v861 = vadd.f32 0.0, %v860
  %v862 = vpop.f32.mrf.mxu0
  %v863 = vadd.f32 0.0, %v862
  %v864 = vpop.f32.mrf.mxu0
  %v865 = vpop.f32.mrf.mxu0
  %866 = vdwg.mxu0
  %v867 = vmax.f32 %v187, %v398
  %v868 = vmax.f32 %v189, %v400
  %v869 = vmax.f32 %v228, %v439
  %v870 = vmax.f32 %v230, %v441
  %v871 = vmax.f32 %v609, %v820
  %v872 = vmax.f32 %v611, %v822
  %v873 = vmax.f32 %v650, %v861
  %v874 = vmax.f32 %v652, %v863
  %v875 = vmax.f32 %v867, %v871
  %v876 = vmax.f32 %v868, %v872
  %v877 = vmax.f32 %v869, %v873
  %v878 = vmax.f32 %v870, %v874
  %v879 = vld [vmem:[%s2] sm:$0xff]
  %881 = vset.pattern.permute.xlu0 0
  %882 = vperm.xlu0 %881, %v879
  %v883 = vpop.permute.xlu0 %882
  %v885 = vadd.f32 %v875, %v883
  %v886 = vadd.f32 %v876, %v883
  %v887 = vadd.f32 %v877, %v883
  %v888 = vadd.f32 %v878, %v883
  %v889 = vmax.f32 %v885, 0.0
  %v890 = vmax.f32 %v886, 0.0
  %v891 = vmax.f32 %v887, 0.0
  %v892 = vmax.f32 %v888, 0.0
  %v893 = vpack.c.bf16 %v889, %v889
  %v894 = vpack.c.bf16 %v890, %v890
  %v895 = vpack.c.bf16 %v891, %v891
  %v896 = vpack.c.bf16 %v892, %v892
  %v901 = vunpack.c.l.b16 %v893
  %v902 = vunpack.c.l.b16 %v894
  %v903 = vunpack.c.l.b16 %v895
  %v904 = vunpack.c.l.b16 %v896
  %v905 = vpack.c.b16 %v902, %v901
  %v906 = vpack.c.b16 %v904, %v903
  %909 = vst [vmem:[%s3] sm:$0xff] %v905
  %vm910 = vcmask 1043456
  %vm911 = vcmask 64516
  %vm912 = vmor %vm911, %vm910
  %913 = vst.msk [vmem:[%s3 + $0x8] sm:$0xff] %vm912, %v906
  // Predicated region
  $region14: #{cnn_forward.3} parent=0 // pred_check
    _
  $region15: #{cnn_forward.3} parent=0 // pred_check_branch
    %915 = sbr.rel (0) target = $region17
  $region16: #{cnn_forward.3} parent=0 // pred_region
    _
  $region17: #{cnn_forward.3} parent=0 // pred_fallthru
    _
  // Predicated region
  $region18: #{cnn_forward.3} parent=0 // pred_check
    _
  $region19: #{cnn_forward.3} parent=0 // pred_check_branch
    %917 = sbr.rel (0) target = $region21
  $region20: #{cnn_forward.3} parent=0 // pred_region
    _
  $region21: #{cnn_forward.3} parent=0 // pred_fallthru
    _

// kernel: cnn_forward.4
$region0: #{cnn_forward.4}
  #allocation0 [shape = 'u32[]', space=smem, size = 0x4, offset = 0x4, fixed_abs, tag = 'smem constant byte address 0x4 - core index']
  #allocation1 [shape = 'u32[144,128]{1,0:T(1,128)}', space=vmem, size = 0x12000, scoped, tag = 'internal scratch']
  %s0 = inlined_call_operand.vmem [shape: bf16[4,150,50], index: 0, kind: input, shape index: {}]
  %s1 = inlined_call_operand.vmem [shape: bf16[16,150], index: 1, kind: input, shape index: {}]
  %s2 = inlined_call_operand.vmem [shape: f32[16,1], index: 2, kind: input, shape index: {}]
  %s3 = inlined_call_operand.vmem [shape: bf16[16,50], index: 3, kind: output, shape index: {}]
  %s4 = sld [smem:[#allocation0]]
  $region22: #{cnn_forward.4} parent=0
    _
  %s6 = ssub.s32 1, %s4
  %s7 = scalar_select 0, %s6, %s4
  // Predicated region
  $region2: #{cnn_forward.4} parent=0 // pred_check
    _
  $region3: #{cnn_forward.4} parent=0 // pred_check_branch
    %9 = sbr.rel (0) target = $region5
  $region4: #{cnn_forward.4} parent=0 // pred_region
    _
  $region5: #{cnn_forward.4} parent=0 // pred_fallthru
    _
  // Predicated region
  $region6: #{cnn_forward.4} parent=0 // pred_check
    _
  $region7: #{cnn_forward.4} parent=0 // pred_check_branch
    %11 = sbr.rel (0) target = $region9
  $region8: #{cnn_forward.4} parent=0 // pred_region
    _
  $region9: #{cnn_forward.4} parent=0 // pred_fallthru
    _
  // Predicated region
  $region10: #{cnn_forward.4} parent=0 // pred_check
    _
  $region11: #{cnn_forward.4} parent=0 // pred_check_branch
    %13 = sbr.rel (0) target = $region13
  $region12: #{cnn_forward.4} parent=0 // pred_region
    _
  $region13: #{cnn_forward.4} parent=0 // pred_fallthru
    _
  %v15 = vld [vmem:[%s1] sm:$0xff]
  %v16 = vld [vmem:[%s1 + $0x8] sm:$0xff]
  %v17 = vld [vmem:[%s0] sm:$0xf]
  %v18 = vld [vmem:[%s0 + $0x4] sm:$0xf]
  %v19 = vld [vmem:[%s0 + $0x8] sm:$0xf]
  %v20 = vld [vmem:[%s0 + $0xc] sm:$0xf]
  %v21 = vld [vmem:[%s0 + $0x10] sm:$0xf]
  %v22 = vld [vmem:[%s0 + $0x14] sm:$0xf]
  %v23 = vld [vmem:[%s0 + $0x18] sm:$0xf]
  %v24 = vld [vmem:[%s0 + $0x1c] sm:$0xf]
  %v25 = vld [vmem:[%s0 + $0x20] sm:$0xf]
  %v26 = vld [vmem:[%s0 + $0x24] sm:$0xf]
  %v27 = vld [vmem:[%s0 + $0x28] sm:$0xf]
  %v28 = vld [vmem:[%s0 + $0x2c] sm:$0xf]
  %v29 = vld [vmem:[%s0 + $0x30] sm:$0xf]
  %v30 = vld [vmem:[%s0 + $0x34] sm:$0xf]
  %v31 = vld [vmem:[%s0 + $0x38] sm:$0xf]
  %v32 = vld [vmem:[%s0 + $0x3c] sm:$0xf]
  %v33 = vld [vmem:[%s0 + $0x40] sm:$0xf]
  %v34 = vld [vmem:[%s0 + $0x44] sm:$0xf]
  %v35 = vld [vmem:[%s0 + $0x48] sm:$0x7]
  %v38 = vunpack.c.l.b16 %v15
  %v39 = vunpack.c.h.b16 %v15
  %v40 = vunpack.c.l.b16 %v16
  %v41 = vunpack.c.h.b16 %v16
  %v42 = vpack.c.b16 %v40, %v38
  %v43 = vpack.c.b16 %v41, %v39
  %v64 = vunpack.c.l.b16 %v17
  %v65 = vunpack.c.l.b16 %v18
  %v66 = vunpack.c.l.b16 %v19
  %v67 = vunpack.c.l.b16 %v20
  %v68 = vunpack.c.l.b16 %v21
  %v69 = vunpack.c.l.b16 %v22
  %v70 = vunpack.c.l.b16 %v23
  %v71 = vunpack.c.l.b16 %v24
  %v72 = vunpack.c.l.b16 %v25
  %v73 = vunpack.c.l.b16 %v26
  %v74 = vunpack.c.l.b16 %v27
  %v75 = vunpack.c.l.b16 %v28
  %v76 = vunpack.c.l.b16 %v29
  %v77 = vunpack.c.l.b16 %v30
  %v78 = vunpack.c.l.b16 %v31
  %v79 = vunpack.c.l.b16 %v32
  %v80 = vunpack.c.l.b16 %v33
  %v81 = vunpack.c.l.b16 %v34
  %v82 = vunpack.c.l.b16 %v35
  %v83 = vpack.c.b16 %v65, %v64
  %v84 = vpack.c.b16 %v67, %v66
  %v85 = vpack.c.b16 %v69, %v68
  %v86 = vpack.c.b16 %v71, %v70
  %v87 = vpack.c.b16 %v73, %v72
  %v88 = vpack.c.b16 %v75, %v74
  %v89 = vpack.c.b16 %v77, %v76
  %v90 = vpack.c.b16 %v79, %v78
  %v91 = vpack.c.b16 %v81, %v80
  %v92 = vpack.c.b16 %v82, %v82
  %vm102 = vcmask 179200
  %v104 = vsel %vm102, %v43, 0
  %vm106 = vcmask 1042432
  %v108 = vsel %vm106, %v92, 0
  %110 = vmatprep.subr.bf16.mxu0 0
  %111 = vmatpush1.bf16.msra.mxu0 %v90
  %112 = vmatprep.subr.bf16.mxu0 0
  %113 = vmatpush1.bf16.msra.mxu0 %v89
  %114 = vmatprep.subr.bf16.mxu0 0
  %115 = vmatpush1.bf16.msra.mxu0 %v88
  %116 = vmatprep.subr.bf16.mxu0 0
  %117 = vmatpush1.bf16.msra.mxu0 %v87
  %118 = vmatprep.subr.bf16.mxu0 0
  %119 = vmatpush1.bf16.msra.mxu0 %v86
  %120 = vmatprep.subr.bf16.mxu0 0
  %121 = vmatpush1.bf16.msra.mxu0 %v85
  %122 = vmatprep.subr.bf16.mxu0 0
  %123 = vmatpush1.bf16.msra.mxu0 %v84
  %124 = vmatprep.subr.bf16.mxu0 0
  %125 = vmatpush1.bf16.msra.mxu0 %v83
  %126 = vmatprep.subr.bf16.mxu0 0
  %127 = vmatpush2.bf16.msra.mxu0 0
  %128 = vmatprep.subr.bf16.mxu0 0
  %129 = vmatpush2.bf16.msra.mxu0 0
  %130 = vmatprep.subr.bf16.mxu0 0
  %131 = vmatpush2.bf16.msra.mxu0 0
  %132 = vmatprep.subr.bf16.mxu0 0
  %133 = vmatpush2.bf16.msra.mxu0 0
  %134 = vmatprep.subr.bf16.mxu0 0
  %135 = vmatpush2.bf16.msra.mxu0 0
  %136 = vmatprep.subr.bf16.mxu0 0
  %137 = vmatpush2.bf16.msra.mxu0 0
  %138 = vmatprep.subr.bf16.mxu0 0
  %139 = vmatpush2.bf16.msra.mxu0 %v108
  %140 = vmatprep.subr.bf16.mxu0 0
  %141 = vmatpush2.bf16.msra.mxu0 %v91
  %142 = vmatprep.mubr.bf16.mxu0 %v104
  %143 = vmatmul.mubr.bf16.gmra.mxu0 %v42
  %v144 = vpop.f32.mrf.mxu0
  %v145 = vadd.f32 0.0, %v144
  %v146 = vpop.f32.mrf.mxu0
  %v147 = vpop.f32.mrf.mxu0
  %v148 = vadd.f32 0.0, %v147
  %v149 = vpop.f32.mrf.mxu0
  %150 = vdwg.mxu0
  %s151 = scalar_lea.vmem %s0, 76
  %v152 = vld [vmem:[%s151] sm:$0xf]
  %v153 = vld [vmem:[%s151 + $0x4] sm:$0xf]
  %v154 = vld [vmem:[%s151 + $0x8] sm:$0xf]
  %v155 = vld [vmem:[%s151 + $0xc] sm:$0xf]
  %v156 = vld [vmem:[%s151 + $0x10] sm:$0xf]
  %v157 = vld [vmem:[%s151 + $0x14] sm:$0xf]
  %v158 = vld [vmem:[%s151 + $0x18] sm:$0xf]
  %v159 = vld [vmem:[%s151 + $0x1c] sm:$0xf]
  %v160 = vld [vmem:[%s151 + $0x20] sm:$0xf]
  %v161 = vld [vmem:[%s151 + $0x24] sm:$0xf]
  %v162 = vld [vmem:[%s151 + $0x28] sm:$0xf]
  %v163 = vld [vmem:[%s151 + $0x2c] sm:$0xf]
  %v164 = vld [vmem:[%s151 + $0x30] sm:$0xf]
  %v165 = vld [vmem:[%s151 + $0x34] sm:$0xf]
  %v166 = vld [vmem:[%s151 + $0x38] sm:$0xf]
  %v167 = vld [vmem:[%s151 + $0x3c] sm:$0xf]
  %v168 = vld [vmem:[%s151 + $0x40] sm:$0xf]
  %v169 = vld [vmem:[%s151 + $0x44] sm:$0xf]
  %v170 = vld [vmem:[%s151 + $0x48] sm:$0x7]
  %v190 = vunpack.c.l.b16 %v152
  %v191 = vunpack.c.l.b16 %v153
  %v192 = vunpack.c.l.b16 %v154
  %v193 = vunpack.c.l.b16 %v155
  %v194 = vunpack.c.l.b16 %v156
  %v195 = vunpack.c.l.b16 %v157
  %v196 = vunpack.c.l.b16 %v158
  %v197 = vunpack.c.l.b16 %v159
  %v198 = vunpack.c.l.b16 %v160
  %v199 = vunpack.c.l.b16 %v161
  %v200 = vunpack.c.l.b16 %v162
  %v201 = vunpack.c.l.b16 %v163
  %v202 = vunpack.c.l.b16 %v164
  %v203 = vunpack.c.l.b16 %v165
  %v204 = vunpack.c.l.b16 %v166
  %v205 = vunpack.c.l.b16 %v167
  %v206 = vunpack.c.l.b16 %v168
  %v207 = vunpack.c.l.b16 %v169
  %v208 = vunpack.c.l.b16 %v170
  %v209 = vpack.c.b16 %v191, %v190
  %v210 = vpack.c.b16 %v193, %v192
  %v211 = vpack.c.b16 %v195, %v194
  %v212 = vpack.c.b16 %v197, %v196
  %v213 = vpack.c.b16 %v199, %v198
  %v214 = vpack.c.b16 %v201, %v200
  %v215 = vpack.c.b16 %v203, %v202
  %v216 = vpack.c.b16 %v205, %v204
  %v217 = vpack.c.b16 %v207, %v206
  %v218 = vpack.c.b16 %v208, %v208
  %v229 = vsel %vm106, %v218, 0
  %231 = vmatprep.subr.bf16.mxu0 0
  %232 = vmatpush1.bf16.msra.mxu0 %v216
  %233 = vmatprep.subr.bf16.mxu0 0
  %234 = vmatpush1.bf16.msra.mxu0 %v215
  %235 = vmatprep.subr.bf16.mxu0 0
  %236 = vmatpush1.bf16.msra.mxu0 %v214
  %237 = vmatprep.subr.bf16.mxu0 0
  %238 = vmatpush1.bf16.msra.mxu0 %v213
  %239 = vmatprep.subr.bf16.mxu0 0
  %240 = vmatpush1.bf16.msra.mxu0 %v212
  %241 = vmatprep.subr.bf16.mxu0 0
  %242 = vmatpush1.bf16.msra.mxu0 %v211
  %243 = vmatprep.subr.bf16.mxu0 0
  %244 = vmatpush1.bf16.msra.mxu0 %v210
  %245 = vmatprep.subr.bf16.mxu0 0
  %246 = vmatpush1.bf16.msra.mxu0 %v209
  %247 = vmatprep.subr.bf16.mxu0 0
  %248 = vmatpush2.bf16.msra.mxu0 0
  %249 = vmatprep.subr.bf16.mxu0 0
  %250 = vmatpush2.bf16.msra.mxu0 0
  %251 = vmatprep.subr.bf16.mxu0 0
  %252 = vmatpush2.bf16.msra.mxu0 0
  %253 = vmatprep.subr.bf16.mxu0 0
  %254 = vmatpush2.bf16.msra.mxu0 0
  %255 = vmatprep.subr.bf16.mxu0 0
  %256 = vmatpush2.bf16.msra.mxu0 0
  %257 = vmatprep.subr.bf16.mxu0 0
  %258 = vmatpush2.bf16.msra.mxu0 0
  %259 = vmatprep.subr.bf16.mxu0 0
  %260 = vmatpush2.bf16.msra.mxu0 %v229
  %261 = vmatprep.subr.bf16.mxu0 0
  %262 = vmatpush2.bf16.msra.mxu0 %v217
  %263 = vmatprep.mubr.bf16.mxu0 %v104
  %264 = vmatmul.mubr.bf16.gmra.mxu0 %v42
  %v265 = vpop.f32.mrf.mxu0
  %v266 = vadd.f32 0.0, %v265
  %v267 = vpop.f32.mrf.mxu0
  %v268 = vpop.f32.mrf.mxu0
  %v269 = vadd.f32 0.0, %v268
  %v270 = vpop.f32.mrf.mxu0
  %271 = vdwg.mxu0
  %s272 = scalar_lea.vmem %s0, 152
  %v273 = vld [vmem:[%s272] sm:$0xf]
  %v274 = vld [vmem:[%s272 + $0x4] sm:$0xf]
  %v275 = vld [vmem:[%s272 + $0x8] sm:$0xf]
  %v276 = vld [vmem:[%s272 + $0xc] sm:$0xf]
  %v277 = vld [vmem:[%s272 + $0x10] sm:$0xf]
  %v278 = vld [vmem:[%s272 + $0x14] sm:$0xf]
  %v279 = vld [vmem:[%s272 + $0x18] sm:$0xf]
  %v280 = vld [vmem:[%s272 + $0x1c] sm:$0xf]
  %v281 = vld [vmem:[%s272 + $0x20] sm:$0xf]
  %v282 = vld [vmem:[%s272 + $0x24] sm:$0xf]
  %v283 = vld [vmem:[%s272 + $0x28] sm:$0xf]
  %v284 = vld [vmem:[%s272 + $0x2c] sm:$0xf]
  %v285 = vld [vmem:[%s272 + $0x30] sm:$0xf]
  %v286 = vld [vmem:[%s272 + $0x34] sm:$0xf]
  %v287 = vld [vmem:[%s272 + $0x38] sm:$0xf]
  %v288 = vld [vmem:[%s272 + $0x3c] sm:$0xf]
  %v289 = vld [vmem:[%s272 + $0x40] sm:$0xf]
  %v290 = vld [vmem:[%s272 + $0x44] sm:$0xf]
  %v291 = vld [vmem:[%s272 + $0x48] sm:$0x7]
  %v311 = vunpack.c.l.b16 %v273
  %v312 = vunpack.c.l.b16 %v274
  %v313 = vunpack.c.l.b16 %v275
  %v314 = vunpack.c.l.b16 %v276
  %v315 = vunpack.c.l.b16 %v277
  %v316 = vunpack.c.l.b16 %v278
  %v317 = vunpack.c.l.b16 %v279
  %v318 = vunpack.c.l.b16 %v280
  %v319 = vunpack.c.l.b16 %v281
  %v320 = vunpack.c.l.b16 %v282
  %v321 = vunpack.c.l.b16 %v283
  %v322 = vunpack.c.l.b16 %v284
  %v323 = vunpack.c.l.b16 %v285
  %v324 = vunpack.c.l.b16 %v286
  %v325 = vunpack.c.l.b16 %v287
  %v326 = vunpack.c.l.b16 %v288
  %v327 = vunpack.c.l.b16 %v289
  %v328 = vunpack.c.l.b16 %v290
  %v329 = vunpack.c.l.b16 %v291
  %v330 = vpack.c.b16 %v312, %v311
  %v331 = vpack.c.b16 %v314, %v313
  %v332 = vpack.c.b16 %v316, %v315
  %v333 = vpack.c.b16 %v318, %v317
  %v334 = vpack.c.b16 %v320, %v319
  %v335 = vpack.c.b16 %v322, %v321
  %v336 = vpack.c.b16 %v324, %v323
  %v337 = vpack.c.b16 %v326, %v325
  %v338 = vpack.c.b16 %v328, %v327
  %v339 = vpack.c.b16 %v329, %v329
  %v350 = vsel %vm106, %v339, 0
  %352 = vmatprep.subr.bf16.mxu0 0
  %353 = vmatpush1.bf16.msra.mxu0 %v337
  %354 = vmatprep.subr.bf16.mxu0 0
  %355 = vmatpush1.bf16.msra.mxu0 %v336
  %356 = vmatprep.subr.bf16.mxu0 0
  %357 = vmatpush1.bf16.msra.mxu0 %v335
  %358 = vmatprep.subr.bf16.mxu0 0
  %359 = vmatpush1.bf16.msra.mxu0 %v334
  %360 = vmatprep.subr.bf16.mxu0 0
  %361 = vmatpush1.bf16.msra.mxu0 %v333
  %362 = vmatprep.subr.bf16.mxu0 0
  %363 = vmatpush1.bf16.msra.mxu0 %v332
  %364 = vmatprep.subr.bf16.mxu0 0
  %365 = vmatpush1.bf16.msra.mxu0 %v331
  %366 = vmatprep.subr.bf16.mxu0 0
  %367 = vmatpush1.bf16.msra.mxu0 %v330
  %368 = vmatprep.subr.bf16.mxu0 0
  %369 = vmatpush2.bf16.msra.mxu0 0
  %370 = vmatprep.subr.bf16.mxu0 0
  %371 = vmatpush2.bf16.msra.mxu0 0
  %372 = vmatprep.subr.bf16.mxu0 0
  %373 = vmatpush2.bf16.msra.mxu0 0
  %374 = vmatprep.subr.bf16.mxu0 0
  %375 = vmatpush2.bf16.msra.mxu0 0
  %376 = vmatprep.subr.bf16.mxu0 0
  %377 = vmatpush2.bf16.msra.mxu0 0
  %378 = vmatprep.subr.bf16.mxu0 0
  %379 = vmatpush2.bf16.msra.mxu0 0
  %380 = vmatprep.subr.bf16.mxu0 0
  %381 = vmatpush2.bf16.msra.mxu0 %v350
  %382 = vmatprep.subr.bf16.mxu0 0
  %383 = vmatpush2.bf16.msra.mxu0 %v338
  %384 = vmatprep.mubr.bf16.mxu0 %v104
  %385 = vmatmul.mubr.bf16.gmra.mxu0 %v42
  %v386 = vpop.f32.mrf.mxu0
  %v387 = vadd.f32 0.0, %v386
  %v388 = vpop.f32.mrf.mxu0
  %v389 = vpop.f32.mrf.mxu0
  %v390 = vadd.f32 0.0, %v389
  %v391 = vpop.f32.mrf.mxu0
  %392 = vdwg.mxu0
  %s393 = scalar_lea.vmem %s0, 228
  %v394 = vld [vmem:[%s393] sm:$0xf]
  %v395 = vld [vmem:[%s393 + $0x4] sm:$0xf]
  %v396 = vld [vmem:[%s393 + $0x8] sm:$0xf]
  %v397 = vld [vmem:[%s393 + $0xc] sm:$0xf]
  %v398 = vld [vmem:[%s393 + $0x10] sm:$0xf]
  %v399 = vld [vmem:[%s393 + $0x14] sm:$0xf]
  %v400 = vld [vmem:[%s393 + $0x18] sm:$0xf]
  %v401 = vld [vmem:[%s393 + $0x1c] sm:$0xf]
  %v402 = vld [vmem:[%s393 + $0x20] sm:$0xf]
  %v403 = vld [vmem:[%s393 + $0x24] sm:$0xf]
  %v404 = vld [vmem:[%s393 + $0x28] sm:$0xf]
  %v405 = vld [vmem:[%s393 + $0x2c] sm:$0xf]
  %v406 = vld [vmem:[%s393 + $0x30] sm:$0xf]
  %v407 = vld [vmem:[%s393 + $0x34] sm:$0xf]
  %v408 = vld [vmem:[%s393 + $0x38] sm:$0xf]
  %v409 = vld [vmem:[%s393 + $0x3c] sm:$0xf]
  %v410 = vld [vmem:[%s393 + $0x40] sm:$0xf]
  %v411 = vld [vmem:[%s393 + $0x44] sm:$0xf]
  %v412 = vld [vmem:[%s393 + $0x48] sm:$0x7]
  %v432 = vunpack.c.l.b16 %v394
  %v433 = vunpack.c.l.b16 %v395
  %v434 = vunpack.c.l.b16 %v396
  %v435 = vunpack.c.l.b16 %v397
  %v436 = vunpack.c.l.b16 %v398
  %v437 = vunpack.c.l.b16 %v399
  %v438 = vunpack.c.l.b16 %v400
  %v439 = vunpack.c.l.b16 %v401
  %v440 = vunpack.c.l.b16 %v402
  %v441 = vunpack.c.l.b16 %v403
  %v442 = vunpack.c.l.b16 %v404
  %v443 = vunpack.c.l.b16 %v405
  %v444 = vunpack.c.l.b16 %v406
  %v445 = vunpack.c.l.b16 %v407
  %v446 = vunpack.c.l.b16 %v408
  %v447 = vunpack.c.l.b16 %v409
  %v448 = vunpack.c.l.b16 %v410
  %v449 = vunpack.c.l.b16 %v411
  %v450 = vunpack.c.l.b16 %v412
  %v451 = vpack.c.b16 %v433, %v432
  %v452 = vpack.c.b16 %v435, %v434
  %v453 = vpack.c.b16 %v437, %v436
  %v454 = vpack.c.b16 %v439, %v438
  %v455 = vpack.c.b16 %v441, %v440
  %v456 = vpack.c.b16 %v443, %v442
  %v457 = vpack.c.b16 %v445, %v444
  %v458 = vpack.c.b16 %v447, %v446
  %v459 = vpack.c.b16 %v449, %v448
  %v460 = vpack.c.b16 %v450, %v450
  %v471 = vsel %vm106, %v460, 0
  %473 = vmatprep.subr.bf16.mxu0 0
  %474 = vmatpush1.bf16.msra.mxu0 %v458
  %475 = vmatprep.subr.bf16.mxu0 0
  %476 = vmatpush1.bf16.msra.mxu0 %v457
  %477 = vmatprep.subr.bf16.mxu0 0
  %478 = vmatpush1.bf16.msra.mxu0 %v456
  %479 = vmatprep.subr.bf16.mxu0 0
  %480 = vmatpush1.bf16.msra.mxu0 %v455
  %481 = vmatprep.subr.bf16.mxu0 0
  %482 = vmatpush1.bf16.msra.mxu0 %v454
  %483 = vmatprep.subr.bf16.mxu0 0
  %484 = vmatpush1.bf16.msra.mxu0 %v453
  %485 = vmatprep.subr.bf16.mxu0 0
  %486 = vmatpush1.bf16.msra.mxu0 %v452
  %487 = vmatprep.subr.bf16.mxu0 0
  %488 = vmatpush1.bf16.msra.mxu0 %v451
  %489 = vmatprep.subr.bf16.mxu0 0
  %490 = vmatpush2.bf16.msra.mxu0 0
  %491 = vmatprep.subr.bf16.mxu0 0
  %492 = vmatpush2.bf16.msra.mxu0 0
  %493 = vmatprep.subr.bf16.mxu0 0
  %494 = vmatpush2.bf16.msra.mxu0 0
  %495 = vmatprep.subr.bf16.mxu0 0
  %496 = vmatpush2.bf16.msra.mxu0 0
  %497 = vmatprep.subr.bf16.mxu0 0
  %498 = vmatpush2.bf16.msra.mxu0 0
  %499 = vmatprep.subr.bf16.mxu0 0
  %500 = vmatpush2.bf16.msra.mxu0 0
  %501 = vmatprep.subr.bf16.mxu0 0
  %502 = vmatpush2.bf16.msra.mxu0 %v471
  %503 = vmatprep.subr.bf16.mxu0 0
  %504 = vmatpush2.bf16.msra.mxu0 %v459
  %505 = vmatprep.mubr.bf16.mxu0 %v104
  %506 = vmatmul.mubr.bf16.gmra.mxu0 %v42
  %v507 = vpop.f32.mrf.mxu0
  %v508 = vadd.f32 0.0, %v507
  %v509 = vpop.f32.mrf.mxu0
  %v510 = vpop.f32.mrf.mxu0
  %v511 = vadd.f32 0.0, %v510
  %v512 = vpop.f32.mrf.mxu0
  %513 = vdwg.mxu0
  %v514 = vmax.f32 %v145, %v266
  %v515 = vmax.f32 %v148, %v269
  %v516 = vmax.f32 %v387, %v508
  %v517 = vmax.f32 %v390, %v511
  %v518 = vmax.f32 %v514, %v516
  %v519 = vmax.f32 %v515, %v517
  %v520 = vld [vmem:[%s2] sm:$0xff]
  %v521 = vld [vmem:[%s2 + $0x8] sm:$0xff]
  %523 = vset.pattern.permute.xlu0 0
  %524 = vperm.xlu0 %523, %v520
  %v525 = vpop.permute.xlu0 %524
  %528 = vset.pattern.permute.xlu0 0
  %529 = vperm.xlu0 %528, %v521
  %v530 = vpop.permute.xlu0 %529
  %v532 = vadd.f32 %v518, %v525
  %v533 = vadd.f32 %v519, %v530
  %v534 = vmax.f32 %v532, 0.0
  %v535 = vmax.f32 %v533, 0.0
  %v536 = vpack.c.bf16 %v535, %v534
  %v538 = vunpack.c.l.b16 %v536
  %v539 = vunpack.c.h.b16 %v536
  %v540 = vpack.c.b16 %v538, %v538
  %v541 = vpack.c.b16 %v539, %v539
  %vm544 = vcmask 404480
  %545 = vst.msk [vmem:[%s3] sm:$0xf] %vm544, %v540
  %546 = vst.msk [vmem:[%s3 + $0x4] sm:$0xf] %vm544, %v541
  // Predicated region
  $region14: #{cnn_forward.4} parent=0 // pred_check
    _
  $region15: #{cnn_forward.4} parent=0 // pred_check_branch
    %548 = sbr.rel (0) target = $region17
  $region16: #{cnn_forward.4} parent=0 // pred_region
    _
  $region17: #{cnn_forward.4} parent=0 // pred_fallthru
    _
  // Predicated region
  $region18: #{cnn_forward.4} parent=0 // pred_check
    _
  $region19: #{cnn_forward.4} parent=0 // pred_check_branch
    %550 = sbr.rel (0) target = $region21
  $region20: #{cnn_forward.4} parent=0 // pred_region
    _
  $region21: #{cnn_forward.4} parent=0 // pred_fallthru
    _

// kernel: cnn_forward.5
$region0: #{cnn_forward.5}
  #allocation0 [shape = 'u32[]', space=smem, size = 0x4, offset = 0x4, fixed_abs, tag = 'smem constant byte address 0x4 - core index']
  #allocation1 [shape = 'u32[144,128]{1,0:T(1,128)}', space=vmem, size = 0x12000, scoped, tag = 'internal scratch']
  %s0 = inlined_call_operand.vmem [shape: bf16[400,2], index: 0, kind: input, shape index: {}]
  %s1 = inlined_call_operand.vmem [shape: bf16[120,400], index: 1, kind: input, shape index: {}]
  %s2 = inlined_call_operand.vmem [shape: f32[120,1], index: 2, kind: input, shape index: {}]
  %s3 = inlined_call_operand.vmem [shape: f32[84,120], index: 3, kind: input, shape index: {}]
  %s4 = inlined_call_operand.vmem [shape: f32[84,1], index: 4, kind: input, shape index: {}]
  %s5 = inlined_call_operand.vmem [shape: f32[10,84], index: 5, kind: input, shape index: {}]
  %s6 = inlined_call_operand.vmem [shape: f32[10,1], index: 6, kind: input, shape index: {}]
  %s7 = inlined_call_operand.vmem [shape: f32[10,2], index: 7, kind: output, shape index: {}]
  %s8 = sld [smem:[#allocation0]]
  $region38: #{cnn_forward.5} parent=0
    _
  %s10 = ssub.s32 1, %s8
  %s11 = scalar_select 0, %s10, %s8
  // Predicated region
  $region2: #{cnn_forward.5} parent=0 // pred_check
    _
  $region3: #{cnn_forward.5} parent=0 // pred_check_branch
    %13 = sbr.rel (0) target = $region5
  $region4: #{cnn_forward.5} parent=0 // pred_region
    _
  $region5: #{cnn_forward.5} parent=0 // pred_fallthru
    _
  // Predicated region
  $region6: #{cnn_forward.5} parent=0 // pred_check
    _
  $region7: #{cnn_forward.5} parent=0 // pred_check_branch
    %15 = sbr.rel (0) target = $region9
  $region8: #{cnn_forward.5} parent=0 // pred_region
    _
  $region9: #{cnn_forward.5} parent=0 // pred_fallthru
    _
  // Predicated region
  $region10: #{cnn_forward.5} parent=0 // pred_check
    _
  $region11: #{cnn_forward.5} parent=0 // pred_check_branch
    %17 = sbr.rel (0) target = $region13
  $region12: #{cnn_forward.5} parent=0 // pred_region
    _
  $region13: #{cnn_forward.5} parent=0 // pred_fallthru
    _
  // Predicated region
  $region14: #{cnn_forward.5} parent=0 // pred_check
    _
  $region15: #{cnn_forward.5} parent=0 // pred_check_branch
    %19 = sbr.rel (0) target = $region17
  $region16: #{cnn_forward.5} parent=0 // pred_region
    _
  $region17: #{cnn_forward.5} parent=0 // pred_fallthru
    _
  // Predicated region
  $region18: #{cnn_forward.5} parent=0 // pred_check
    _
  $region19: #{cnn_forward.5} parent=0 // pred_check_branch
    %21 = sbr.rel (0) target = $region21
  $region20: #{cnn_forward.5} parent=0 // pred_region
    _
  $region21: #{cnn_forward.5} parent=0 // pred_fallthru
    _
  // Predicated region
  $region22: #{cnn_forward.5} parent=0 // pred_check
    _
  $region23: #{cnn_forward.5} parent=0 // pred_check_branch
    %23 = sbr.rel (0) target = $region25
  $region24: #{cnn_forward.5} parent=0 // pred_region
    _
  $region25: #{cnn_forward.5} parent=0 // pred_fallthru
    _
  // Predicated region
  $region26: #{cnn_forward.5} parent=0 // pred_check
    _
  $region27: #{cnn_forward.5} parent=0 // pred_check_branch
    %25 = sbr.rel (0) target = $region29
  $region28: #{cnn_forward.5} parent=0 // pred_region
    _
  $region29: #{cnn_forward.5} parent=0 // pred_fallthru
    _
  %v27 = vld [vmem:[%s1] sm:$0xff]
  %v28 = vld [vmem:[%s1 + $0x8] sm:$0xff]
  %v29 = vld [vmem:[%s1 + $0x10] sm:$0xff]
  %v30 = vld [vmem:[%s1 + $0x18] sm:$0xff]
  %v31 = vld [vmem:[%s1 + $0x20] sm:$0xff]
  %v32 = vld [vmem:[%s1 + $0x28] sm:$0xff]
  %v33 = vld [vmem:[%s1 + $0x30] sm:$0xff]
  %v34 = vld [vmem:[%s1 + $0x38] sm:$0xff]
  %v35 = vld [vmem:[%s1 + $0x40] sm:$0xff]
  %v36 = vld [vmem:[%s1 + $0x48] sm:$0xff]
  %v37 = vld [vmem:[%s1 + $0x50] sm:$0xff]
  %v38 = vld [vmem:[%s1 + $0x58] sm:$0xff]
  %v39 = vld [vmem:[%s1 + $0x60] sm:$0xff]
  %v40 = vld [vmem:[%s1 + $0x68] sm:$0xff]
  %v41 = vld [vmem:[%s1 + $0x70] sm:$0xff]
  %v42 = vld [vmem:[%s1 + $0x78] sm:$0xff]
  %v43 = vld [vmem:[%s1 + $0x80] sm:$0xff]
  %v44 = vld [vmem:[%s1 + $0x88] sm:$0xff]
  %v45 = vld [vmem:[%s1 + $0x90] sm:$0xff]
  %v46 = vld [vmem:[%s1 + $0x98] sm:$0xff]
  %v47 = vld [vmem:[%s1 + $0xa0] sm:$0xff]
  %v48 = vld [vmem:[%s1 + $0xa8] sm:$0xff]
  %v49 = vld [vmem:[%s1 + $0xb0] sm:$0xff]
  %v50 = vld [vmem:[%s1 + $0xb8] sm:$0xff]
  %v51 = vld [vmem:[%s1 + $0xc0] sm:$0xff]
  %v52 = vld [vmem:[%s1 + $0xc8] sm:$0xff]
  %v53 = vld [vmem:[%s1 + $0xd0] sm:$0xff]
  %v54 = vld [vmem:[%s1 + $0xd8] sm:$0xff]
  %v55 = vld [vmem:[%s1 + $0xe0] sm:$0xff]
  %v56 = vld [vmem:[%s1 + $0xe8] sm:$0xff]
  %v57 = vld [vmem:[%s0] sm:$0xf]
  %v58 = vld [vmem:[%s0 + $0x4] sm:$0xf]
  %v59 = vld [vmem:[%s0 + $0x8] sm:$0xf]
  %v60 = vld [vmem:[%s0 + $0xc] sm:$0xf]
  %v61 = vld [vmem:[%s0 + $0x10] sm:$0xf]
  %v62 = vld [vmem:[%s0 + $0x14] sm:$0xf]
  %v63 = vld [vmem:[%s0 + $0x18] sm:$0xf]
  %v64 = vld [vmem:[%s0 + $0x1c] sm:$0xf]
  %v65 = vld [vmem:[%s0 + $0x20] sm:$0xf]
  %v66 = vld [vmem:[%s0 + $0x24] sm:$0xf]
  %v67 = vld [vmem:[%s0 + $0x28] sm:$0xf]
  %v68 = vld [vmem:[%s0 + $0x2c] sm:$0xf]
  %v69 = vld [vmem:[%s0 + $0x30] sm:$0xf]
  %v70 = vld [vmem:[%s0 + $0x34] sm:$0xf]
  %v71 = vld [vmem:[%s0 + $0x38] sm:$0xf]
  %v72 = vld [vmem:[%s0 + $0x3c] sm:$0xf]
  %v73 = vld [vmem:[%s0 + $0x40] sm:$0xf]
  %v74 = vld [vmem:[%s0 + $0x44] sm:$0xf]
  %v75 = vld [vmem:[%s0 + $0x48] sm:$0xf]
  %v76 = vld [vmem:[%s0 + $0x4c] sm:$0xf]
  %v77 = vld [vmem:[%s0 + $0x50] sm:$0xf]
  %v78 = vld [vmem:[%s0 + $0x54] sm:$0xf]
  %v79 = vld [vmem:[%s0 + $0x58] sm:$0xf]
  %v80 = vld [vmem:[%s0 + $0x5c] sm:$0xf]
  %v81 = vld [vmem:[%s0 + $0x60] sm:$0xf]
  %v82 = vld [vmem:[%s0 + $0x64] sm:$0xf]
  %v83 = vld [vmem:[%s0 + $0x68] sm:$0xf]
  %v84 = vld [vmem:[%s0 + $0x6c] sm:$0xf]
  %v85 = vld [vmem:[%s0 + $0x70] sm:$0xf]
  %v86 = vld [vmem:[%s0 + $0x74] sm:$0xf]
  %v87 = vld [vmem:[%s0 + $0x78] sm:$0xf]
  %v88 = vld [vmem:[%s0 + $0x7c] sm:$0xf]
  %v89 = vld [vmem:[%s0 + $0x80] sm:$0xf]
  %v90 = vld [vmem:[%s0 + $0x84] sm:$0xf]
  %v91 = vld [vmem:[%s0 + $0x88] sm:$0xf]
  %v92 = vld [vmem:[%s0 + $0x8c] sm:$0xf]
  %v93 = vld [vmem:[%s0 + $0x90] sm:$0xf]
  %v94 = vld [vmem:[%s0 + $0x94] sm:$0xf]
  %v95 = vld [vmem:[%s0 + $0x98] sm:$0xf]
  %v96 = vld [vmem:[%s0 + $0x9c] sm:$0xf]
  %v97 = vld [vmem:[%s0 + $0xa0] sm:$0xf]
  %v98 = vld [vmem:[%s0 + $0xa4] sm:$0xf]
  %v99 = vld [vmem:[%s0 + $0xa8] sm:$0xf]
  %v100 = vld [vmem:[%s0 + $0xac] sm:$0xf]
  %v101 = vld [vmem:[%s0 + $0xb0] sm:$0xf]
  %v102 = vld [vmem:[%s0 + $0xb4] sm:$0xf]
  %v103 = vld [vmem:[%s0 + $0xb8] sm:$0xf]
  %v104 = vld [vmem:[%s0 + $0xbc] sm:$0xf]
  %v105 = vld [vmem:[%s0 + $0xc0] sm:$0xf]
  %v106 = vld [vmem:[%s0 + $0xc4] sm:$0xf]
  %v107 = vld [vmem:[%s2] sm:$0xff]
  %v108 = vld [vmem:[%s2 + $0x8] sm:$0xff]
  %v109 = vld [vmem:[%s2 + $0x10] sm:$0xff]
  %v110 = vld [vmem:[%s2 + $0x18] sm:$0xff]
  %v111 = vld [vmem:[%s2 + $0x20] sm:$0xff]
  %v112 = vld [vmem:[%s2 + $0x28] sm:$0xff]
  %v113 = vld [vmem:[%s2 + $0x30] sm:$0xff]
  %v114 = vld [vmem:[%s2 + $0x38] sm:$0xff]
  %v115 = vld [vmem:[%s2 + $0x40] sm:$0xff]
  %v116 = vld [vmem:[%s2 + $0x48] sm:$0xff]
  %v117 = vld [vmem:[%s2 + $0x50] sm:$0xff]
  %v118 = vld [vmem:[%s2 + $0x58] sm:$0xff]
  %v119 = vld [vmem:[%s2 + $0x60] sm:$0xff]
  %v120 = vld [vmem:[%s2 + $0x68] sm:$0xff]
  %v121 = vld [vmem:[%s2 + $0x70] sm:$0xff]
  %123 = vset.pattern.permute.xlu0 0
  %124 = vperm.xlu0 %123, %v107
  %v125 = vpop.permute.xlu0 %124
  %128 = vset.pattern.permute.xlu0 0
  %129 = vperm.xlu0 %128, %v108
  %v130 = vpop.permute.xlu0 %129
  %133 = vset.pattern.permute.xlu0 0
  %134 = vperm.xlu0 %133, %v109
  %v135 = vpop.permute.xlu0 %134
  %138 = vset.pattern.permute.xlu0 0
  %139 = vperm.xlu0 %138, %v110
  %v140 = vpop.permute.xlu0 %139
  %143 = vset.pattern.permute.xlu0 0
  %144 = vperm.xlu0 %143, %v111
  %v145 = vpop.permute.xlu0 %144
  %148 = vset.pattern.permute.xlu0 0
  %149 = vperm.xlu0 %148, %v112
  %v150 = vpop.permute.xlu0 %149
  %153 = vset.pattern.permute.xlu0 0
  %154 = vperm.xlu0 %153, %v113
  %v155 = vpop.permute.xlu0 %154
  %158 = vset.pattern.permute.xlu0 0
  %159 = vperm.xlu0 %158, %v114
  %v160 = vpop.permute.xlu0 %159
  %163 = vset.pattern.permute.xlu0 0
  %164 = vperm.xlu0 %163, %v115
  %v165 = vpop.permute.xlu0 %164
  %168 = vset.pattern.permute.xlu0 0
  %169 = vperm.xlu0 %168, %v116
  %v170 = vpop.permute.xlu0 %169
  %173 = vset.pattern.permute.xlu0 0
  %174 = vperm.xlu0 %173, %v117
  %v175 = vpop.permute.xlu0 %174
  %178 = vset.pattern.permute.xlu0 0
  %179 = vperm.xlu0 %178, %v118
  %v180 = vpop.permute.xlu0 %179
  %183 = vset.pattern.permute.xlu0 0
  %184 = vperm.xlu0 %183, %v119
  %v185 = vpop.permute.xlu0 %184
  %188 = vset.pattern.permute.xlu0 0
  %189 = vperm.xlu0 %188, %v120
  %v190 = vpop.permute.xlu0 %189
  %193 = vset.pattern.permute.xlu0 0
  %194 = vperm.xlu0 %193, %v121
  %v195 = vpop.permute.xlu0 %194
  %v227 = vunpack.c.l.b16 %v27
  %v228 = vunpack.c.h.b16 %v27
  %v229 = vunpack.c.l.b16 %v28
  %v230 = vunpack.c.h.b16 %v28
  %v231 = vunpack.c.l.b16 %v29
  %v232 = vunpack.c.h.b16 %v29
  %v233 = vunpack.c.l.b16 %v30
  %v234 = vunpack.c.h.b16 %v30
  %v235 = vunpack.c.l.b16 %v31
  %v236 = vunpack.c.h.b16 %v31
  %v237 = vunpack.c.l.b16 %v32
  %v238 = vunpack.c.h.b16 %v32
  %v239 = vunpack.c.l.b16 %v33
  %v240 = vunpack.c.h.b16 %v33
  %v241 = vunpack.c.l.b16 %v34
  %v242 = vunpack.c.h.b16 %v34
  %v243 = vunpack.c.l.b16 %v35
  %v244 = vunpack.c.h.b16 %v35
  %v245 = vunpack.c.l.b16 %v36
  %v246 = vunpack.c.h.b16 %v36
  %v247 = vunpack.c.l.b16 %v37
  %v248 = vunpack.c.h.b16 %v37
  %v249 = vunpack.c.l.b16 %v38
  %v250 = vunpack.c.h.b16 %v38
  %v251 = vunpack.c.l.b16 %v39
  %v252 = vunpack.c.h.b16 %v39
  %v253 = vunpack.c.l.b16 %v40
  %v254 = vunpack.c.h.b16 %v40
  %v255 = vunpack.c.l.b16 %v41
  %v256 = vunpack.c.h.b16 %v41
  %v257 = vunpack.c.l.b16 %v42
  %v258 = vunpack.c.h.b16 %v42
  %v259 = vunpack.c.l.b16 %v43
  %v260 = vunpack.c.h.b16 %v43
  %v261 = vunpack.c.l.b16 %v44
  %v262 = vunpack.c.h.b16 %v44
  %v263 = vunpack.c.l.b16 %v45
  %v264 = vunpack.c.h.b16 %v45
  %v265 = vunpack.c.l.b16 %v46
  %v266 = vunpack.c.h.b16 %v46
  %v267 = vunpack.c.l.b16 %v47
  %v268 = vunpack.c.h.b16 %v47
  %v269 = vunpack.c.l.b16 %v48
  %v270 = vunpack.c.h.b16 %v48
  %v271 = vunpack.c.l.b16 %v49
  %v272 = vunpack.c.h.b16 %v49
  %v273 = vunpack.c.l.b16 %v50
  %v274 = vunpack.c.h.b16 %v50
  %v275 = vunpack.c.l.b16 %v51
  %v276 = vunpack.c.h.b16 %v51
  %v277 = vunpack.c.l.b16 %v52
  %v278 = vunpack.c.h.b16 %v52
  %v279 = vunpack.c.l.b16 %v53
  %v280 = vunpack.c.h.b16 %v53
  %v281 = vunpack.c.l.b16 %v54
  %v282 = vunpack.c.h.b16 %v54
  %v283 = vunpack.c.l.b16 %v55
  %v284 = vunpack.c.h.b16 %v55
  %v285 = vunpack.c.l.b16 %v56
  %v286 = vunpack.c.h.b16 %v56
  %v287 = vpack.c.b16 %v231, %v227
  %v288 = vpack.c.b16 %v232, %v228
  %v289 = vpack.c.b16 %v233, %v229
  %v290 = vpack.c.b16 %v234, %v230
  %v291 = vpack.c.b16 %v239, %v235
  %v292 = vpack.c.b16 %v240, %v236
  %v293 = vpack.c.b16 %v241, %v237
  %v294 = vpack.c.b16 %v242, %v238
  %v295 = vpack.c.b16 %v247, %v243
  %v296 = vpack.c.b16 %v248, %v244
  %v297 = vpack.c.b16 %v249, %v245
  %v298 = vpack.c.b16 %v250, %v246
  %v299 = vpack.c.b16 %v255, %v251
  %v300 = vpack.c.b16 %v256, %v252
  %v301 = vpack.c.b16 %v257, %v253
  %v302 = vpack.c.b16 %v258, %v254
  %v303 = vpack.c.b16 %v263, %v259
  %v304 = vpack.c.b16 %v264, %v260
  %v305 = vpack.c.b16 %v265, %v261
  %v306 = vpack.c.b16 %v266, %v262
  %v307 = vpack.c.b16 %v271, %v267
  %v308 = vpack.c.b16 %v272, %v268
  %v309 = vpack.c.b16 %v273, %v269
  %v310 = vpack.c.b16 %v274, %v270
  %v311 = vpack.c.b16 %v279, %v275
  %v312 = vpack.c.b16 %v280, %v276
  %v313 = vpack.c.b16 %v281, %v277
  %v314 = vpack.c.b16 %v282, %v278
  %v315 = vpack.c.b16 %v283, %v283
  %v316 = vpack.c.b16 %v284, %v284
  %v317 = vpack.c.b16 %v285, %v285
  %v318 = vpack.c.b16 %v286, %v286
  %v393 = vunpack.c.l.b16 %v57
  %v394 = vunpack.c.l.b16 %v58
  %v395 = vunpack.c.l.b16 %v59
  %v396 = vunpack.c.l.b16 %v60
  %v397 = vunpack.c.l.b16 %v61
  %v398 = vunpack.c.l.b16 %v62
  %v399 = vunpack.c.l.b16 %v63
  %v400 = vunpack.c.l.b16 %v64
  %v401 = vunpack.c.l.b16 %v65
  %v402 = vunpack.c.l.b16 %v66
  %v403 = vunpack.c.l.b16 %v67
  %v404 = vunpack.c.l.b16 %v68
  %v405 = vunpack.c.l.b16 %v69
  %v406 = vunpack.c.l.b16 %v70
  %v407 = vunpack.c.l.b16 %v71
  %v408 = vunpack.c.l.b16 %v72
  %v409 = vunpack.c.l.b16 %v73
  %v410 = vunpack.c.l.b16 %v74
  %v411 = vunpack.c.l.b16 %v75
  %v412 = vunpack.c.l.b16 %v76
  %v413 = vunpack.c.l.b16 %v77
  %v414 = vunpack.c.l.b16 %v78
  %v415 = vunpack.c.l.b16 %v79
  %v416 = vunpack.c.l.b16 %v80
  %v417 = vunpack.c.l.b16 %v81
  %v418 = vunpack.c.l.b16 %v82
  %v419 = vunpack.c.l.b16 %v83
  %v420 = vunpack.c.l.b16 %v84
  %v421 = vunpack.c.l.b16 %v85
  %v422 = vunpack.c.l.b16 %v86
  %v423 = vunpack.c.l.b16 %v87
  %v424 = vunpack.c.l.b16 %v88
  %v425 = vunpack.c.l.b16 %v89
  %v426 = vunpack.c.l.b16 %v90
  %v427 = vunpack.c.l.b16 %v91
  %v428 = vunpack.c.l.b16 %v92
  %v429 = vunpack.c.l.b16 %v93
  %v430 = vunpack.c.l.b16 %v94
  %v431 = vunpack.c.l.b16 %v95
  %v432 = vunpack.c.l.b16 %v96
  %v433 = vunpack.c.l.b16 %v97
  %v434 = vunpack.c.l.b16 %v98
  %v435 = vunpack.c.l.b16 %v99
  %v436 = vunpack.c.l.b16 %v100
  %v437 = vunpack.c.l.b16 %v101
  %v438 = vunpack.c.l.b16 %v102
  %v439 = vunpack.c.l.b16 %v103
  %v440 = vunpack.c.l.b16 %v104
  %v441 = vunpack.c.l.b16 %v105
  %v442 = vunpack.c.l.b16 %v106
  %v443 = vpack.c.b16 %v394, %v393
  %v444 = vpack.c.b16 %v396, %v395
  %v445 = vpack.c.b16 %v398, %v397
  %v446 = vpack.c.b16 %v400, %v399
  %v447 = vpack.c.b16 %v402, %v401
  %v448 = vpack.c.b16 %v404, %v403
  %v449 = vpack.c.b16 %v406, %v405
  %v450 = vpack.c.b16 %v408, %v407
  %v451 = vpack.c.b16 %v410, %v409
  %v452 = vpack.c.b16 %v412, %v411
  %v453 = vpack.c.b16 %v414, %v413
  %v454 = vpack.c.b16 %v416, %v415
  %v455 = vpack.c.b16 %v418, %v417
  %v456 = vpack.c.b16 %v420, %v419
  %v457 = vpack.c.b16 %v422, %v421
  %v458 = vpack.c.b16 %v424, %v423
  %v459 = vpack.c.b16 %v426, %v425
  %v460 = vpack.c.b16 %v428, %v427
  %v461 = vpack.c.b16 %v430, %v429
  %v462 = vpack.c.b16 %v432, %v431
  %v463 = vpack.c.b16 %v434, %v433
  %v464 = vpack.c.b16 %v436, %v435
  %v465 = vpack.c.b16 %v438, %v437
  %v466 = vpack.c.b16 %v440, %v439
  %v467 = vpack.c.b16 %v442, %v441
  %vm493 = vcmask 130048
  %v495 = vsel %vm493, %v290, 0
  %v498 = vsel %vm493, %v294, 0
  %v501 = vsel %vm493, %v298, 0
  %v504 = vsel %vm493, %v302, 0
  %v507 = vsel %vm493, %v306, 0
  %v510 = vsel %vm493, %v310, 0
  %v513 = vsel %vm493, %v314, 0
  %v516 = vsel %vm493, %v318, 0
  %518 = vmatprep.subr.bf16.mxu0 0
  %519 = vmatpush1.bf16.msra.mxu0 %v450
  %520 = vmatprep.subr.bf16.mxu0 0
  %521 = vmatpush1.bf16.msra.mxu0 %v449
  %522 = vmatprep.subr.bf16.mxu0 0
  %523 = vmatpush1.bf16.msra.mxu0 %v448
  %524 = vmatprep.subr.bf16.mxu0 0
  %525 = vmatpush1.bf16.msra.mxu0 %v447
  %526 = vmatprep.subr.bf16.mxu0 0
  %527 = vmatpush1.bf16.msra.mxu0 %v446
  %528 = vmatprep.subr.bf16.mxu0 0
  %529 = vmatpush1.bf16.msra.mxu0 %v445
  %530 = vmatprep.subr.bf16.mxu0 0
  %531 = vmatpush1.bf16.msra.mxu0 %v444
  %532 = vmatprep.subr.bf16.mxu0 0
  %533 = vmatpush1.bf16.msra.mxu0 %v443
  %534 = vmatprep.subr.bf16.mxu0 0
  %535 = vmatpush2.bf16.msra.mxu0 %v458
  %536 = vmatprep.subr.bf16.mxu0 0
  %537 = vmatpush2.bf16.msra.mxu0 %v457
  %538 = vmatprep.subr.bf16.mxu0 0
  %539 = vmatpush2.bf16.msra.mxu0 %v456
  %540 = vmatprep.subr.bf16.mxu0 0
  %541 = vmatpush2.bf16.msra.mxu0 %v455
  %542 = vmatprep.subr.bf16.mxu0 0
  %543 = vmatpush2.bf16.msra.mxu0 %v454
  %544 = vmatprep.subr.bf16.mxu0 0
  %545 = vmatpush2.bf16.msra.mxu0 %v453
  %546 = vmatprep.subr.bf16.mxu0 0
  %547 = vmatpush2.bf16.msra.mxu0 %v452
  %548 = vmatprep.subr.bf16.mxu0 0
  %549 = vmatpush2.bf16.msra.mxu0 %v451
  %550 = vmatprep.mubr.bf16.mxu0 %v288
  %551 = vmatmul.mubr.bf16.gmra.mxu0 %v287
  %v552 = vpop.f32.mrf.mxu0
  %v553 = vadd.f32 %v125, %v552
  %v554 = vpop.f32.mrf.mxu0
  %v555 = vpop.f32.mrf.mxu0
  %v556 = vadd.f32 %v130, %v555
  %v557 = vpop.f32.mrf.mxu0
  %558 = vmatprep.mubr.bf16.mxu0 %v292
  %559 = vmatmul.mubr.bf16.gmra.mxu0 %v291
  %v560 = vpop.f32.mrf.mxu0
  %v561 = vadd.f32 %v135, %v560
  %v562 = vpop.f32.mrf.mxu0
  %v563 = vpop.f32.mrf.mxu0
  %v564 = vadd.f32 %v140, %v563
  %v565 = vpop.f32.mrf.mxu0
  %566 = vmatprep.mubr.bf16.mxu0 %v296
  %567 = vmatmul.mubr.bf16.gmra.mxu0 %v295
  %v568 = vpop.f32.mrf.mxu0
  %v569 = vadd.f32 %v145, %v568
  %v570 = vpop.f32.mrf.mxu0
  %v571 = vpop.f32.mrf.mxu0
  %v572 = vadd.f32 %v150, %v571
  %v573 = vpop.f32.mrf.mxu0
  %574 = vmatprep.mubr.bf16.mxu0 %v300
  %575 = vmatmul.mubr.bf16.gmra.mxu0 %v299
  %v576 = vpop.f32.mrf.mxu0
  %v577 = vadd.f32 %v155, %v576
  %v578 = vpop.f32.mrf.mxu0
  %v579 = vpop.f32.mrf.mxu0
  %v580 = vadd.f32 %v160, %v579
  %v581 = vpop.f32.mrf.mxu0
  %582 = vmatprep.mubr.bf16.mxu0 %v304
  %583 = vmatmul.mubr.bf16.gmra.mxu0 %v303
  %v584 = vpop.f32.mrf.mxu0
  %v585 = vadd.f32 %v165, %v584
  %v586 = vpop.f32.mrf.mxu0
  %v587 = vpop.f32.mrf.mxu0
  %v588 = vadd.f32 %v170, %v587
  %v589 = vpop.f32.mrf.mxu0
  %590 = vmatprep.mubr.bf16.mxu0 %v308
  %591 = vmatmul.mubr.bf16.gmra.mxu0 %v307
  %v592 = vpop.f32.mrf.mxu0
  %v593 = vadd.f32 %v175, %v592
  %v594 = vpop.f32.mrf.mxu0
  %v595 = vpop.f32.mrf.mxu0
  %v596 = vadd.f32 %v180, %v595
  %v597 = vpop.f32.mrf.mxu0
  %598 = vmatprep.mubr.bf16.mxu0 %v312
  %599 = vmatmul.mubr.bf16.gmra.mxu0 %v311
  %v600 = vpop.f32.mrf.mxu0
  %v601 = vadd.f32 %v185, %v600
  %v602 = vpop.f32.mrf.mxu0
  %v603 = vpop.f32.mrf.mxu0
  %v604 = vadd.f32 %v190, %v603
  %v605 = vpop.f32.mrf.mxu0
  %606 = vmatprep.mubr.bf16.mxu0 %v316
  %607 = vmatmul.mubr.bf16.gmra.mxu0 %v315
  %v608 = vpop.f32.mrf.mxu0
  %v609 = vadd.f32 %v195, %v608
  %v610 = vpop.f32.mrf.mxu0
  %v611 = vpop.f32.mrf.mxu0
  %v612 = vpop.f32.mrf.mxu0
  %613 = vdwg.mxu0
  %614 = vmatprep.subr.bf16.mxu0 0
  %615 = vmatpush1.bf16.msra.mxu0 %v466
  %616 = vmatprep.subr.bf16.mxu0 0
  %617 = vmatpush1.bf16.msra.mxu0 %v465
  %618 = vmatprep.subr.bf16.mxu0 0
  %619 = vmatpush1.bf16.msra.mxu0 %v464
  %620 = vmatprep.subr.bf16.mxu0 0
  %621 = vmatpush1.bf16.msra.mxu0 %v463
  %622 = vmatprep.subr.bf16.mxu0 0
  %623 = vmatpush1.bf16.msra.mxu0 %v462
  %624 = vmatprep.subr.bf16.mxu0 0
  %625 = vmatpush1.bf16.msra.mxu0 %v461
  %626 = vmatprep.subr.bf16.mxu0 0
  %627 = vmatpush1.bf16.msra.mxu0 %v460
  %628 = vmatprep.subr.bf16.mxu0 0
  %629 = vmatpush1.bf16.msra.mxu0 %v459
  %630 = vmatprep.subr.bf16.mxu0 0
  %631 = vmatpush2.bf16.msra.mxu0 0
  %632 = vmatprep.subr.bf16.mxu0 0
  %633 = vmatpush2.bf16.msra.mxu0 0
  %634 = vmatprep.subr.bf16.mxu0 0
  %635 = vmatpush2.bf16.msra.mxu0 0
  %636 = vmatprep.subr.bf16.mxu0 0
  %637 = vmatpush2.bf16.msra.mxu0 0
  %638 = vmatprep.subr.bf16.mxu0 0
  %639 = vmatpush2.bf16.msra.mxu0 0
  %640 = vmatprep.subr.bf16.mxu0 0
  %641 = vmatpush2.bf16.msra.mxu0 0
  %642 = vmatprep.subr.bf16.mxu0 0
  %643 = vmatpush2.bf16.msra.mxu0 0
  %644 = vmatprep.subr.bf16.mxu0 0
  %645 = vmatpush2.bf16.msra.mxu0 %v467
  %646 = vmatprep.mubr.bf16.mxu0 %v495
  %647 = vmatmul.mubr.bf16.gmra.mxu0 %v289
  %v648 = vpop.f32.mrf.mxu0
  %v649 = vadd.f32 %v553, %v648
  %v650 = vpop.f32.mrf.mxu0
  %v651 = vpop.f32.mrf.mxu0
  %v652 = vadd.f32 %v556, %v651
  %v653 = vpop.f32.mrf.mxu0
  %654 = vmatprep.mubr.bf16.mxu0 %v498
  %655 = vmatmul.mubr.bf16.gmra.mxu0 %v293
  %v656 = vpop.f32.mrf.mxu0
  %v657 = vadd.f32 %v561, %v656
  %v658 = vpop.f32.mrf.mxu0
  %v659 = vpop.f32.mrf.mxu0
  %v660 = vadd.f32 %v564, %v659
  %v661 = vpop.f32.mrf.mxu0
  %662 = vmatprep.mubr.bf16.mxu0 %v501
  %663 = vmatmul.mubr.bf16.gmra.mxu0 %v297
  %v664 = vpop.f32.mrf.mxu0
  %v665 = vadd.f32 %v569, %v664
  %v666 = vpop.f32.mrf.mxu0
  %v667 = vpop.f32.mrf.mxu0
  %v668 = vadd.f32 %v572, %v667
  %v669 = vpop.f32.mrf.mxu0
  %670 = vmatprep.mubr.bf16.mxu0 %v504
  %671 = vmatmul.mubr.bf16.gmra.mxu0 %v301
  %v672 = vpop.f32.mrf.mxu0
  %v673 = vadd.f32 %v577, %v672
  %v674 = vpop.f32.mrf.mxu0
  %v675 = vpop.f32.mrf.mxu0
  %v676 = vadd.f32 %v580, %v675
  %v677 = vpop.f32.mrf.mxu0
  %678 = vmatprep.mubr.bf16.mxu0 %v507
  %679 = vmatmul.mubr.bf16.gmra.mxu0 %v305
  %v680 = vpop.f32.mrf.mxu0
  %v681 = vadd.f32 %v585, %v680
  %v682 = vpop.f32.mrf.mxu0
  %v683 = vpop.f32.mrf.mxu0
  %v684 = vadd.f32 %v588, %v683
  %v685 = vpop.f32.mrf.mxu0
  %686 = vmatprep.mubr.bf16.mxu0 %v510
  %687 = vmatmul.mubr.bf16.gmra.mxu0 %v309
  %v688 = vpop.f32.mrf.mxu0
  %v689 = vadd.f32 %v593, %v688
  %v690 = vpop.f32.mrf.mxu0
  %v691 = vpop.f32.mrf.mxu0
  %v692 = vadd.f32 %v596, %v691
  %v693 = vpop.f32.mrf.mxu0
  %694 = vmatprep.mubr.bf16.mxu0 %v513
  %695 = vmatmul.mubr.bf16.gmra.mxu0 %v313
  %v696 = vpop.f32.mrf.mxu0
  %v697 = vadd.f32 %v601, %v696
  %v698 = vpop.f32.mrf.mxu0
  %v699 = vpop.f32.mrf.mxu0
  %v700 = vadd.f32 %v604, %v699
  %v701 = vpop.f32.mrf.mxu0
  %702 = vmatprep.mubr.bf16.mxu0 %v516
  %703 = vmatmul.mubr.bf16.gmra.mxu0 %v317
  %v704 = vpop.f32.mrf.mxu0
  %v705 = vadd.f32 %v609, %v704
  %v706 = vpop.f32.mrf.mxu0
  %v707 = vpop.f32.mrf.mxu0
  %v708 = vpop.f32.mrf.mxu0
  %709 = vdwg.mxu0
  %v710 = vmax.f32 %v649, 0.0
  %v711 = vmax.f32 %v652, 0.0
  %v712 = vmax.f32 %v657, 0.0
  %v713 = vmax.f32 %v660, 0.0
  %v714 = vmax.f32 %v665, 0.0
  %v715 = vmax.f32 %v668, 0.0
  %v716 = vmax.f32 %v673, 0.0
  %v717 = vmax.f32 %v676, 0.0
  %v718 = vmax.f32 %v681, 0.0
  %v719 = vmax.f32 %v684, 0.0
  %v720 = vmax.f32 %v689, 0.0
  %v721 = vmax.f32 %v692, 0.0
  %v722 = vmax.f32 %v697, 0.0
  %v723 = vmax.f32 %v700, 0.0
  %v724 = vmax.f32 %v705, 0.0
  %v725 = vld [vmem:[%s3] sm:$0xff]
  %v726 = vld [vmem:[%s3 + $0x8] sm:$0xff]
  %v727 = vld [vmem:[%s3 + $0x10] sm:$0xff]
  %v728 = vld [vmem:[%s3 + $0x18] sm:$0xff]
  %v729 = vld [vmem:[%s3 + $0x20] sm:$0xff]
  %v730 = vld [vmem:[%s3 + $0x28] sm:$0xff]
  %v731 = vld [vmem:[%s3 + $0x30] sm:$0xff]
  %v732 = vld [vmem:[%s3 + $0x38] sm:$0xff]
  %v733 = vld [vmem:[%s3 + $0x40] sm:$0xff]
  %v734 = vld [vmem:[%s3 + $0x48] sm:$0xff]
  %v735 = vld [vmem:[%s3 + $0x50] sm:$0xf]
  %v736 = vld [vmem:[%s4] sm:$0xff]
  %v737 = vld [vmem:[%s4 + $0x8] sm:$0xff]
  %v738 = vld [vmem:[%s4 + $0x10] sm:$0xff]
  %v739 = vld [vmem:[%s4 + $0x18] sm:$0xff]
  %v740 = vld [vmem:[%s4 + $0x20] sm:$0xff]
  %v741 = vld [vmem:[%s4 + $0x28] sm:$0xff]
  %v742 = vld [vmem:[%s4 + $0x30] sm:$0xff]
  %v743 = vld [vmem:[%s4 + $0x38] sm:$0xff]
  %v744 = vld [vmem:[%s4 + $0x40] sm:$0xff]
  %v745 = vld [vmem:[%s4 + $0x48] sm:$0xff]
  %v746 = vld [vmem:[%s4 + $0x50] sm:$0xf]
  %748 = vset.pattern.permute.xlu0 0
  %749 = vperm.xlu0 %748, %v736
  %v750 = vpop.permute.xlu0 %749
  %753 = vset.pattern.permute.xlu0 0
  %754 = vperm.xlu0 %753, %v737
  %v755 = vpop.permute.xlu0 %754
  %758 = vset.pattern.permute.xlu0 0
  %759 = vperm.xlu0 %758, %v738
  %v760 = vpop.permute.xlu0 %759
  %763 = vset.pattern.permute.xlu0 0
  %764 = vperm.xlu0 %763, %v739
  %v765 = vpop.permute.xlu0 %764
  %768 = vset.pattern.permute.xlu0 0
  %769 = vperm.xlu0 %768, %v740
  %v770 = vpop.permute.xlu0 %769
  %773 = vset.pattern.permute.xlu0 0
  %774 = vperm.xlu0 %773, %v741
  %v775 = vpop.permute.xlu0 %774
  %778 = vset.pattern.permute.xlu0 0
  %779 = vperm.xlu0 %778, %v742
  %v780 = vpop.permute.xlu0 %779
  %783 = vset.pattern.permute.xlu0 0
  %784 = vperm.xlu0 %783, %v743
  %v785 = vpop.permute.xlu0 %784
  %788 = vset.pattern.permute.xlu0 0
  %789 = vperm.xlu0 %788, %v744
  %v790 = vpop.permute.xlu0 %789
  %793 = vset.pattern.permute.xlu0 0
  %794 = vperm.xlu0 %793, %v745
  %v795 = vpop.permute.xlu0 %794
  %798 = vset.pattern.permute.xlu0 0
  %799 = vperm.xlu0 %798, %v746
  %v800 = vpop.permute.xlu0 %799
  %vm802 = vcmask 982016
  %v804 = vsel %vm802, %v725, 0
  %v807 = vsel %vm802, %v726, 0
  %v810 = vsel %vm802, %v727, 0
  %v813 = vsel %vm802, %v728, 0
  %v816 = vsel %vm802, %v729, 0
  %v819 = vsel %vm802, %v730, 0
  %v822 = vsel %vm802, %v731, 0
  %v825 = vsel %vm802, %v732, 0
  %v828 = vsel %vm802, %v733, 0
  %v831 = vsel %vm802, %v734, 0
  %v834 = vsel %vm802, %v735, 0
  %836 = vmatprep.subr.mxu0 0.0
  %837 = vmatpush1.msra.mxu0 0.0
  %838 = vmatprep.subr.mxu0 0.0
  %839 = vmatpush1.msra.mxu0 %v724
  %840 = vmatprep.subr.mxu0 0.0
  %841 = vmatpush1.msra.mxu0 %v723
  %842 = vmatprep.subr.mxu0 0.0
  %843 = vmatpush1.msra.mxu0 %v722
  %844 = vmatprep.subr.mxu0 0.0
  %845 = vmatpush1.msra.mxu0 %v721
  %846 = vmatprep.subr.mxu0 0.0
  %847 = vmatpush1.msra.mxu0 %v720
  %848 = vmatprep.subr.mxu0 0.0
  %849 = vmatpush1.msra.mxu0 %v719
  %850 = vmatprep.subr.mxu0 0.0
  %851 = vmatpush1.msra.mxu0 %v718
  %852 = vmatprep.subr.mxu0 0.0
  %853 = vmatpush1.msra.mxu0 %v717
  %854 = vmatprep.subr.mxu0 0.0
  %855 = vmatpush1.msra.mxu0 %v716
  %856 = vmatprep.subr.mxu0 0.0
  %857 = vmatpush1.msra.mxu0 %v715
  %858 = vmatprep.subr.mxu0 0.0
  %859 = vmatpush1.msra.mxu0 %v714
  %860 = vmatprep.subr.mxu0 0.0
  %861 = vmatpush1.msra.mxu0 %v713
  %862 = vmatprep.subr.mxu0 0.0
  %863 = vmatpush1.msra.mxu0 %v712
  %864 = vmatprep.subr.mxu0 0.0
  %865 = vmatpush1.msra.mxu0 %v711
  %866 = vmatprep.subr.mxu0 0.0
  %867 = vmatpush1.msra.mxu0 %v710
  %868 = vmatprep.subr.mxu0 0.0
  %869 = vmatpush2.msra.mxu0 0.0
  %870 = vmatprep.subr.mxu0 0.0
  %871 = vmatpush2.msra.mxu0 0.0
  %872 = vmatprep.subr.mxu0 0.0
  %873 = vmatpush2.msra.mxu0 0.0
  %874 = vmatprep.subr.mxu0 0.0
  %875 = vmatpush2.msra.mxu0 0.0
  %876 = vmatprep.subr.mxu0 0.0
  %877 = vmatpush2.msra.mxu0 0.0
  %878 = vmatprep.subr.mxu0 0.0
  %879 = vmatpush2.msra.mxu0 0.0
  %880 = vmatprep.subr.mxu0 0.0
  %881 = vmatpush2.msra.mxu0 0.0
  %882 = vmatprep.subr.mxu0 0.0
  %883 = vmatpush2.msra.mxu0 0.0
  %884 = vmatprep.subr.mxu0 0.0
  %885 = vmatpush2.msra.mxu0 0.0
  %886 = vmatprep.subr.mxu0 0.0
  %887 = vmatpush2.msra.mxu0 0.0
  %888 = vmatprep.subr.mxu0 0.0
  %889 = vmatpush2.msra.mxu0 0.0
  %890 = vmatprep.subr.mxu0 0.0
  %891 = vmatpush2.msra.mxu0 0.0
  %892 = vmatprep.subr.mxu0 0.0
  %893 = vmatpush2.msra.mxu0 0.0
  %894 = vmatprep.subr.mxu0 0.0
  %895 = vmatpush2.msra.mxu0 0.0
  %896 = vmatprep.subr.mxu0 0.0
  %897 = vmatpush2.msra.mxu0 0.0
  %898 = vmatprep.subr.mxu0 0.0
  %899 = vmatpush2.msra.mxu0 0.0
  %900 = vmatprep.mubr.f32.mxu0 0.0
  %901 = vmatmul.mubr.f32.gmra.mxu0 %v804
  %v902 = vpop.f32.mrf.mxu0
  %v903 = vadd.f32 %v750, %v902
  %v904 = vpop.f32.mrf.mxu0
  %905 = vmatprep.mubr.f32.mxu0 0.0
  %906 = vmatmul.mubr.f32.gmra.mxu0 %v807
  %v907 = vpop.f32.mrf.mxu0
  %v908 = vadd.f32 %v755, %v907
  %v909 = vpop.f32.mrf.mxu0
  %910 = vmatprep.mubr.f32.mxu0 0.0
  %911 = vmatmul.mubr.f32.gmra.mxu0 %v810
  %v912 = vpop.f32.mrf.mxu0
  %v913 = vadd.f32 %v760, %v912
  %v914 = vpop.f32.mrf.mxu0
  %915 = vmatprep.mubr.f32.mxu0 0.0
  %916 = vmatmul.mubr.f32.gmra.mxu0 %v813
  %v917 = vpop.f32.mrf.mxu0
  %v918 = vadd.f32 %v765, %v917
  %v919 = vpop.f32.mrf.mxu0
  %920 = vmatprep.mubr.f32.mxu0 0.0
  %921 = vmatmul.mubr.f32.gmra.mxu0 %v816
  %v922 = vpop.f32.mrf.mxu0
  %v923 = vadd.f32 %v770, %v922
  %v924 = vpop.f32.mrf.mxu0
  %925 = vmatprep.mubr.f32.mxu0 0.0
  %926 = vmatmul.mubr.f32.gmra.mxu0 %v819
  %v927 = vpop.f32.mrf.mxu0
  %v928 = vadd.f32 %v775, %v927
  %v929 = vpop.f32.mrf.mxu0
  %930 = vmatprep.mubr.f32.mxu0 0.0
  %931 = vmatmul.mubr.f32.gmra.mxu0 %v822
  %v932 = vpop.f32.mrf.mxu0
  %v933 = vadd.f32 %v780, %v932
  %v934 = vpop.f32.mrf.mxu0
  %935 = vmatprep.mubr.f32.mxu0 0.0
  %936 = vmatmul.mubr.f32.gmra.mxu0 %v825
  %v937 = vpop.f32.mrf.mxu0
  %v938 = vadd.f32 %v785, %v937
  %v939 = vpop.f32.mrf.mxu0
  %940 = vmatprep.mubr.f32.mxu0 0.0
  %941 = vmatmul.mubr.f32.gmra.mxu0 %v828
  %v942 = vpop.f32.mrf.mxu0
  %v943 = vadd.f32 %v790, %v942
  %v944 = vpop.f32.mrf.mxu0
  %945 = vmatprep.mubr.f32.mxu0 0.0
  %946 = vmatmul.mubr.f32.gmra.mxu0 %v831
  %v947 = vpop.f32.mrf.mxu0
  %v948 = vadd.f32 %v795, %v947
  %v949 = vpop.f32.mrf.mxu0
  %950 = vmatprep.mubr.f32.mxu0 0.0
  %951 = vmatmul.mubr.f32.gmra.mxu0 %v834
  %v952 = vpop.f32.mrf.mxu0
  %v953 = vadd.f32 %v800, %v952
  %v954 = vpop.f32.mrf.mxu0
  %955 = vdwg.mxu0
  %v956 = vmax.f32 %v903, 0.0
  %v957 = vmax.f32 %v908, 0.0
  %v958 = vmax.f32 %v913, 0.0
  %v959 = vmax.f32 %v918, 0.0
  %v960 = vmax.f32 %v923, 0.0
  %v961 = vmax.f32 %v928, 0.0
  %v962 = vmax.f32 %v933, 0.0
  %v963 = vmax.f32 %v938, 0.0
  %v964 = vmax.f32 %v943, 0.0
  %v965 = vmax.f32 %v948, 0.0
  %v966 = vmax.f32 %v953, 0.0
  %v967 = vld [vmem:[%s5] sm:$0xff]
  %v968 = vld [vmem:[%s5 + $0x8] sm:$0x3]
  %v969 = vld [vmem:[%s6] sm:$0xff]
  %v970 = vld [vmem:[%s6 + $0x8] sm:$0x3]
  %972 = vset.pattern.permute.xlu0 0
  %973 = vperm.xlu0 %972, %v969
  %v974 = vpop.permute.xlu0 %973
  %977 = vset.pattern.permute.xlu0 0
  %978 = vperm.xlu0 %977, %v970
  %v979 = vpop.permute.xlu0 %978
  %vm981 = vcmask 687104
  %v983 = vsel %vm981, %v967, 0
  %v986 = vsel %vm981, %v968, 0
  %vm988 = vcmask 1043456
  %v990 = vsel %vm988, %v966, 0
  %992 = vmatprep.subr.mxu0 0.0
  %993 = vmatpush1.msra.mxu0 0.0
  %994 = vmatprep.subr.mxu0 0.0
  %995 = vmatpush1.msra.mxu0 0.0
  %996 = vmatprep.subr.mxu0 0.0
  %997 = vmatpush1.msra.mxu0 0.0
  %998 = vmatprep.subr.mxu0 0.0
  %999 = vmatpush1.msra.mxu0 0.0
  %1000 = vmatprep.subr.mxu0 0.0
  %1001 = vmatpush1.msra.mxu0 0.0
  %1002 = vmatprep.subr.mxu0 0.0
  %1003 = vmatpush1.msra.mxu0 %v990
  %1004 = vmatprep.subr.mxu0 0.0
  %1005 = vmatpush1.msra.mxu0 %v965
  %1006 = vmatprep.subr.mxu0 0.0
  %1007 = vmatpush1.msra.mxu0 %v964
  %1008 = vmatprep.subr.mxu0 0.0
  %1009 = vmatpush1.msra.mxu0 %v963
  %1010 = vmatprep.subr.mxu0 0.0
  %1011 = vmatpush1.msra.mxu0 %v962
  %1012 = vmatprep.subr.mxu0 0.0
  %1013 = vmatpush1.msra.mxu0 %v961
  %1014 = vmatprep.subr.mxu0 0.0
  %1015 = vmatpush1.msra.mxu0 %v960
  %1016 = vmatprep.subr.mxu0 0.0
  %1017 = vmatpush1.msra.mxu0 %v959
  %1018 = vmatprep.subr.mxu0 0.0
  %1019 = vmatpush1.msra.mxu0 %v958
  %1020 = vmatprep.subr.mxu0 0.0
  %1021 = vmatpush1.msra.mxu0 %v957
  %1022 = vmatprep.subr.mxu0 0.0
  %1023 = vmatpush1.msra.mxu0 %v956
  %1024 = vmatprep.subr.mxu0 0.0
  %1025 = vmatpush2.msra.mxu0 0.0
  %1026 = vmatprep.subr.mxu0 0.0
  %1027 = vmatpush2.msra.mxu0 0.0
  %1028 = vmatprep.subr.mxu0 0.0
  %1029 = vmatpush2.msra.mxu0 0.0
  %1030 = vmatprep.subr.mxu0 0.0
  %1031 = vmatpush2.msra.mxu0 0.0
  %1032 = vmatprep.subr.mxu0 0.0
  %1033 = vmatpush2.msra.mxu0 0.0
  %1034 = vmatprep.subr.mxu0 0.0
  %1035 = vmatpush2.msra.mxu0 0.0
  %1036 = vmatprep.subr.mxu0 0.0
  %1037 = vmatpush2.msra.mxu0 0.0
  %1038 = vmatprep.subr.mxu0 0.0
  %1039 = vmatpush2.msra.mxu0 0.0
  %1040 = vmatprep.subr.mxu0 0.0
  %1041 = vmatpush2.msra.mxu0 0.0
  %1042 = vmatprep.subr.mxu0 0.0
  %1043 = vmatpush2.msra.mxu0 0.0
  %1044 = vmatprep.subr.mxu0 0.0
  %1045 = vmatpush2.msra.mxu0 0.0
  %1046 = vmatprep.subr.mxu0 0.0
  %1047 = vmatpush2.msra.mxu0 0.0
  %1048 = vmatprep.subr.mxu0 0.0
  %1049 = vmatpush2.msra.mxu0 0.0
  %1050 = vmatprep.subr.mxu0 0.0
  %1051 = vmatpush2.msra.mxu0 0.0
  %1052 = vmatprep.subr.mxu0 0.0
  %1053 = vmatpush2.msra.mxu0 0.0
  %1054 = vmatprep.subr.mxu0 0.0
  %1055 = vmatpush2.msra.mxu0 0.0
  %1056 = vmatprep.mubr.f32.mxu0 0.0
  %1057 = vmatmul.mubr.f32.gmra.mxu0 %v983
  %v1058 = vpop.f32.mrf.mxu0
  %v1059 = vadd.f32 %v974, %v1058
  %v1060 = vpop.f32.mrf.mxu0
  %1061 = vmatprep.mubr.f32.mxu0 0.0
  %1062 = vmatmul.mubr.f32.gmra.mxu0 %v986
  %v1063 = vpop.f32.mrf.mxu0
  %v1064 = vadd.f32 %v979, %v1063
  %v1065 = vpop.f32.mrf.mxu0
  %1066 = vdwg.mxu0
  %vm1067 = vcmask 15360
  %1068 = vst.msk [vmem:[%s7] sm:$0xff] %vm1067, %v1059
  %vm1069 = vcmask 9216
  %1070 = vst.msk [vmem:[%s7 + $0x8] sm:$0x3] %vm1069, %v1064
  // Predicated region
  $region30: #{cnn_forward.5} parent=0 // pred_check
    _
  $region31: #{cnn_forward.5} parent=0 // pred_check_branch
    %1072 = sbr.rel (0) target = $region33
  $region32: #{cnn_forward.5} parent=0 // pred_region
    _
  $region33: #{cnn_forward.5} parent=0 // pred_fallthru
    _
  // Predicated region
  $region34: #{cnn_forward.5} parent=0 // pred_check
    _
  $region35: #{cnn_forward.5} parent=0 // pred_check_branch
    %1074 = sbr.rel (0) target = $region37
  $region36: #{cnn_forward.5} parent=0 // pred_region
    _
  $region37: #{cnn_forward.5} parent=0 // pred_fallthru
    _

</llo_original>
